<compile_context>
chip_gen: v5e
topology: v5e:2x2
jax: 0.10.0
libtpu: 0.0.40
codegen_flags: <defaults>
</compile_context>

<pallas_src>
import numpy as np

import jax
import jax.numpy as jnp
from jax.experimental import pallas as pl
from jax.experimental.pallas import tpu as pltpu


def _round_up(x, m):
    return (x + m - 1) // m * m


def _pick_tile(b):
    """Pick (batch_tile, padded_batch).  Tiny batches: one ragged tile (no pad);
    otherwise multiples of 8, <=64 rows, >=2 tiles so v7x megacore shards."""
    if b <= 16:
        return b, b
    n_tiles = max(2, -(-b // 64))
    tb = _round_up(-(-b // n_tiles), 8)
    return tb, tb * n_tiles


# ----------------------------------------------------------------------------
# Fused whole-network kernel
# ----------------------------------------------------------------------------
def _lenet_kernel(x_ref, w1b_ref, b1_ref, w2b_ref, b2_ref,
                  fc1w_ref, fc1b_ref, fc2w_ref, fc2b_ref, fc3w_ref, fc3b_ref,
                  o_ref, c1s_ref, p1s_ref, c2s_ref):
    tb = x_ref.shape[0]

    # ---- conv1 (1->6, 5x5) + ReLU + 2x2/2 maxpool ------------------------
    # 5 row-tap matmuls against banded weights; the pool-x offset is folded
    # into two 128-lane column parity blocks of the banded matrix.
    acc1 = jnp.dot(x_ref[:, 0:24, :].reshape(tb * 24, 28), w1b_ref[0],
                   preferred_element_type=jnp.float32)
    for ki in range(1, 5):
        acc1 = acc1 + jnp.dot(x_ref[:, ki:ki + 24, :].reshape(tb * 24, 28),
                              w1b_ref[ki], preferred_element_type=jnp.float32)
    # max over pool-x parity (lane-aligned slices), rows = (b, y), y in [0,24)
    c1s_ref[...] = jnp.maximum(acc1[:, :128], acc1[:, 128:]).reshape(tb, 24, 128)
    # max over pool-y parity via stride-2 row loads, then bias + ReLU
    p1 = jnp.maximum(c1s_ref[:, pl.ds(0, 12, 2), :],
                     c1s_ref[:, pl.ds(1, 12, 2), :])            # (tb, 12, 128)
    p1s_ref[...] = jnp.maximum(p1 + b1_ref[...], 0.0)

    # ---- conv2 (6->16, 5x5) + ReLU + 2x2/2 maxpool -----------------------
    acc2 = jnp.dot(p1s_ref[:, 0:8, :].reshape(tb * 8, 128), w2b_ref[0],
                   preferred_element_type=jnp.float32)
    for ki in range(1, 5):
        acc2 = acc2 + jnp.dot(p1s_ref[:, ki:ki + 8, :].reshape(tb * 8, 128),
                              w2b_ref[ki], preferred_element_type=jnp.float32)
    # max over pool-x parity; rows = (b, y2), y2 in [0,8)
    c2s_ref[...] = jnp.maximum(acc2[:, :128], acc2[:, 128:])    # (tb*8, 128)

    # ---- pool-y for conv2 + bias + ReLU, directly feeding fc1 ------------
    # Row (b, y2) lives at global row b*8 + y2, so one pooled row per image is
    # a stride-8 load; fc1 is accumulated per pooled row with permuted weights.
    h = jnp.zeros((tb, 128), jnp.float32)
    for py2 in range(4):
        even = c2s_ref[pl.ds(2 * py2, tb, 8), :]
        odd = c2s_ref[pl.ds(2 * py2 + 1, tb, 8), :]
        feat = jnp.maximum(jnp.maximum(even, odd) + b2_ref[...], 0.0)   # (tb,128)
        h = h + jnp.dot(feat, fc1w_ref[py2], preferred_element_type=jnp.float32)
    h = jnp.maximum(h + fc1b_ref[...], 0.0)
    h = jnp.maximum(jnp.dot(h, fc2w_ref[...], preferred_element_type=jnp.float32)
                    + fc2b_ref[...], 0.0)
    h = jnp.dot(h, fc3w_ref[...], preferred_element_type=jnp.float32) + fc3b_ref[...]
    o_ref[...] = h.astype(o_ref.dtype)


# ----------------------------------------------------------------------------
# One-time parameter preparation: banded conv weights + permuted/padded FC
# ----------------------------------------------------------------------------
def prepare_params(p):
    w1 = np.asarray(p["conv1_w"], np.float32)    # (6, 1, 5, 5)
    b1 = np.asarray(p["conv1_b"], np.float32)
    w2 = np.asarray(p["conv2_w"], np.float32)    # (16, 6, 5, 5)
    b2 = np.asarray(p["conv2_b"], np.float32)
    f1w = np.asarray(p["fc1_w"], np.float32)     # (120, 256)
    f1b = np.asarray(p["fc1_b"], np.float32)
    f2w = np.asarray(p["fc2_w"], np.float32)     # (84, 120)
    f2b = np.asarray(p["fc2_b"], np.float32)
    f3w = np.asarray(p["fc3_w"], np.float32)     # (10, 84)
    f3b = np.asarray(p["fc3_b"], np.float32)

    # conv1 banded weights: [ki, x_in, dx*128 + px*6 + c],  x_conv = 2*px + dx
    w1b = np.zeros((5, 28, 256), np.float32)
    for ki in range(5):
        for dx in range(2):
            for px in range(12):
                for kj in range(5):
                    xin = 2 * px + dx + kj
                    col = dx * 128 + px * 6
                    w1b[ki, xin, col:col + 6] = w1[:, 0, ki, kj]
    b1row = np.zeros((1, 128), np.float32)
    for px in range(12):
        b1row[0, px * 6:px * 6 + 6] = b1

    # conv2 banded weights: [ki, px_in*6 + c_in, dx*128 + px2*16 + co]
    w2b = np.zeros((5, 128, 256), np.float32)
    for ki in range(5):
        for dx in range(2):
            for px2 in range(4):
                for kj in range(5):
                    pxin = 2 * px2 + dx + kj
                    col = dx * 128 + px2 * 16
                    w2b[ki, pxin * 6:pxin * 6 + 6, col:col + 16] = w2[:, :, ki, kj].T
    b2row = np.zeros((1, 128), np.float32)
    for px2 in range(4):
        b2row[0, px2 * 16:px2 * 16 + 16] = b2

    # fc1: kernel feature layout per pooled row py2 is col = px2*16 + co;
    # PyTorch .view(-1, 256) order is co*16 + py2*4 + px2 -> permute rows.
    fc1wb = np.zeros((4, 128, 128), np.float32)
    for py2 in range(4):
        for px2 in range(4):
            for co in range(16):
                fc1wb[py2, px2 * 16 + co, :120] = f1w[:, co * 16 + py2 * 4 + px2]
    fc1b = np.zeros((1, 128), np.float32); fc1b[0, :120] = f1b
    fc2wb = np.zeros((128, 128), np.float32); fc2wb[:120, :84] = f2w.T
    fc2b = np.zeros((1, 128), np.float32); fc2b[0, :84] = f2b
    fc3wb = np.zeros((128, 128), np.float32); fc3wb[:84, :10] = f3w.T
    fc3b = np.zeros((1, 128), np.float32); fc3b[0, :10] = f3b

    arrays = dict(w1b=w1b, b1=b1row, w2b=w2b, b2=b2row,
                  fc1w=fc1wb, fc1b=fc1b, fc2w=fc2wb, fc2b=fc2b,
                  fc3w=fc3wb, fc3b=fc3b)
    return {k: jnp.asarray(v) for k, v in arrays.items()}


# ----------------------------------------------------------------------------
# Full forward pass (mirrors ConvNet.forward) — single pallas_call
# ----------------------------------------------------------------------------
def convnet_forward(x, kp):
    x = x.reshape(-1, 28, 28).astype(jnp.float32)     # matches .view(-1,1,28,28)
    b = x.shape[0]
    tb, b_pad = _pick_tile(b)
    if b_pad != b:
        x = jnp.pad(x, ((0, b_pad - b), (0, 0), (0, 0)))

    out = pl.pallas_call(
        _lenet_kernel,
        out_shape=jax.ShapeDtypeStruct((b_pad, 128), jnp.float32),
        grid=(b_pad // tb,),
        in_specs=[
            pl.BlockSpec((tb, 28, 28), lambda i: (i, 0, 0)),     # input tile
            pl.BlockSpec((5, 28, 256), lambda i: (0, 0, 0)),     # conv1 banded W
            pl.BlockSpec((1, 128), lambda i: (0, 0)),            # conv1 bias
            pl.BlockSpec((5, 128, 256), lambda i: (0, 0, 0)),    # conv2 banded W
            pl.BlockSpec((1, 128), lambda i: (0, 0)),            # conv2 bias
            pl.BlockSpec((4, 128, 128), lambda i: (0, 0, 0)),    # fc1 W (per py2)
            pl.BlockSpec((1, 128), lambda i: (0, 0)),            # fc1 bias
            pl.BlockSpec((128, 128), lambda i: (0, 0)),          # fc2 W
            pl.BlockSpec((1, 128), lambda i: (0, 0)),            # fc2 bias
            pl.BlockSpec((128, 128), lambda i: (0, 0)),          # fc3 W
            pl.BlockSpec((1, 128), lambda i: (0, 0)),            # fc3 bias
        ],
        out_specs=pl.BlockSpec((tb, 128), lambda i: (i, 0)),
        scratch_shapes=[
            pltpu.VMEM((tb, 24, 128), jnp.float32),   # conv1 pre-pool-y
            pltpu.VMEM((tb, 12, 128), jnp.float32),   # pooled conv1 activations
            pltpu.VMEM((tb * 8, 128), jnp.float32),   # conv2 pre-pool-y
        ],
        compiler_params=pltpu.CompilerParams(
            dimension_semantics=("parallel",)),
    )(x, kp["w1b"], kp["b1"], kp["w2b"], kp["b2"],
      kp["fc1w"], kp["fc1b"], kp["fc2w"], kp["fc2b"], kp["fc3w"], kp["fc3b"])

    return out[:b, :10]


# ----------------------------------------------------------------------------
# Pure-JAX reference (for correctness check only)
# ----------------------------------------------------------------------------
def reference_forward(x, p):
    x = x.reshape(-1, 1, 28, 28)

    def conv(x, w, b):
        y = jax.lax.conv_general_dilated(
            x, w, (1, 1), "VALID", dimension_numbers=("NCHW", "OIHW", "NCHW"))
        return y + b[None, :, None, None]

    def pool(x):
        return jax.lax.reduce_window(
            x, -jnp.inf, jax.lax.max, (1, 1, 2, 2), (1, 1, 2, 2), "VALID")

    x = pool(jax.nn.relu(conv(x, p["conv1_w"], p["conv1_b"])))
    x = pool(jax.nn.relu(conv(x, p["conv2_w"], p["conv2_b"])))
    x = x.reshape(x.shape[0], -1)
    x = jax.nn.relu(x @ p["fc1_w"].T + p["fc1_b"])
    x = jax.nn.relu(x @ p["fc2_w"].T + p["fc2_b"])
    return x @ p["fc3_w"].T + p["fc3_b"]


# ----------------------------------------------------------------------------
# Deterministic parameter init (shapes from ConvNet.__init__)
# ----------------------------------------------------------------------------
def init_params(key):
    ks = jax.random.split(key, 10)

    def w(k, shape, scale):
        return (scale * jax.random.normal(k, shape)).astype(jnp.float32)

    return {
        "conv1_w": w(ks[0], (6, 1, 5, 5), 0.2),
        "conv1_b": w(ks[1], (6,), 0.1),
        "conv2_w": w(ks[2], (16, 6, 5, 5), 0.08),
        "conv2_b": w(ks[3], (16,), 0.1),
        "fc1_w":   w(ks[4], (120, 256), 0.06),
        "fc1_b":   w(ks[5], (120,), 0.1),
        "fc2_w":   w(ks[6], (84, 120), 0.09),
        "fc2_b":   w(ks[7], (84,), 0.1),
        "fc3_w":   w(ks[8], (10, 84), 0.1),
        "fc3_b":   w(ks[9], (10,), 0.1),
    }


if __name__ == "__main__":
    key = jax.random.PRNGKey(0)
    pkey, xkey = jax.random.split(key)
    params = init_params(pkey)
    kparams = prepare_params(params)      # one-time banded/permuted weight prep

    # Batch of 2 "MNIST-like" images, NCHW (forward reshapes to (-1, 28, 28)).
    x = jax.random.normal(xkey, (2, 1, 28, 28), dtype=jnp.float32)

    fwd = jax.jit(convnet_forward)
    out = jax.block_until_ready(fwd(x, kparams))
    ref = jax.block_until_ready(reference_forward(x, params))

    assert out.shape == (2, 10), out.shape
    assert jnp.allclose(out, ref, atol=2e-3, rtol=2e-3), (
        f"max abs diff {jnp.max(jnp.abs(out - ref))}")

    print("KERNEL_OK")
</pallas_src>

<mosaic_0001>
module attributes {stable_mosaic.version = 11 : i64} {
  func.func @_lenet_kernel(%arg0: i32, %arg1: memref<2x28x28xf32, #tpu.memory_space<vmem>>, %arg2: memref<5x28x256xf32, #tpu.memory_space<vmem>>, %arg3: memref<1x128xf32, #tpu.memory_space<vmem>>, %arg4: memref<5x128x256xf32, #tpu.memory_space<vmem>>, %arg5: memref<1x128xf32, #tpu.memory_space<vmem>>, %arg6: memref<4x128x128xf32, #tpu.memory_space<vmem>>, %arg7: memref<1x128xf32, #tpu.memory_space<vmem>>, %arg8: memref<128x128xf32, #tpu.memory_space<vmem>>, %arg9: memref<1x128xf32, #tpu.memory_space<vmem>>, %arg10: memref<128x128xf32, #tpu.memory_space<vmem>>, %arg11: memref<1x128xf32, #tpu.memory_space<vmem>>, %arg12: memref<2x128xf32, #tpu.memory_space<vmem>>, %arg13: memref<2x24x128xf32, #tpu.memory_space<vmem>>, %arg14: memref<2x12x128xf32, #tpu.memory_space<vmem>>, %arg15: memref<16x128xf32, #tpu.memory_space<vmem>>) attributes {dimension_semantics = [#tpu.dimension_semantics<parallel>], iteration_bounds = array<i64: 1>, scalar_prefetch = 0 : i64, scratch_operands = 3 : i64, tpu.core_type = #tpu.core_type<tc>, window_params = [{transform_indices = @transform_0, window_bounds = array<i64: 2, 28, 28>}, {pipeline_mode = #tpu.pipeline_mode<synchronous>, transform_indices = @transform_1, window_bounds = array<i64: 5, 28, 256>}, {pipeline_mode = #tpu.pipeline_mode<synchronous>, transform_indices = @transform_2, window_bounds = array<i64: 1, 128>}, {pipeline_mode = #tpu.pipeline_mode<synchronous>, transform_indices = @transform_3, window_bounds = array<i64: 5, 128, 256>}, {pipeline_mode = #tpu.pipeline_mode<synchronous>, transform_indices = @transform_4, window_bounds = array<i64: 1, 128>}, {pipeline_mode = #tpu.pipeline_mode<synchronous>, transform_indices = @transform_5, window_bounds = array<i64: 4, 128, 128>}, {pipeline_mode = #tpu.pipeline_mode<synchronous>, transform_indices = @transform_6, window_bounds = array<i64: 1, 128>}, {pipeline_mode = #tpu.pipeline_mode<synchronous>, transform_indices = @transform_7, window_bounds = array<i64: 128, 128>}, {pipeline_mode = #tpu.pipeline_mode<synchronous>, transform_indices = @transform_8, window_bounds = array<i64: 1, 128>}, {pipeline_mode = #tpu.pipeline_mode<synchronous>, transform_indices = @transform_9, window_bounds = array<i64: 128, 128>}, {pipeline_mode = #tpu.pipeline_mode<synchronous>, transform_indices = @transform_10, window_bounds = array<i64: 1, 128>}, {transform_indices = @transform_11, window_bounds = array<i64: 2, 128>}]} {
    %c0 = arith.constant 0 : index
    %c0_0 = arith.constant 0 : index
    %c0_1 = arith.constant 0 : index
    %0 = vector.load %arg1[%c0, %c0_0, %c0_1] : memref<2x28x28xf32, #tpu.memory_space<vmem>>, vector<2x24x28xf32>
    %1 = vector.shape_cast %0 : vector<2x24x28xf32> to vector<48x28xf32>
    %c0_2 = arith.constant 0 : index
    %c0_3 = arith.constant 0 : index
    %c0_4 = arith.constant 0 : index
    %2 = vector.load %arg2[%c0_2, %c0_3, %c0_4] : memref<5x28x256xf32, #tpu.memory_space<vmem>>, vector<1x28x256xf32>
    %3 = vector.shape_cast %2 : vector<1x28x256xf32> to vector<28x256xf32>
    %cst = arith.constant dense<0.000000e+00> : vector<48x256xf32>
    %4 = tpu.matmul %1, %3, %cst {dimension_numbers = #tpu.dot_dimension_numbers<[1], [0], [0], [1], [0, 0, 1, 1], [], []>} : vector<48x28xf32>, vector<28x256xf32>, vector<48x256xf32> -> vector<48x256xf32>
    %c0_5 = arith.constant 0 : index
    %c1 = arith.constant 1 : index
    %c0_6 = arith.constant 0 : index
    %5 = vector.load %arg1[%c0_5, %c1, %c0_6] : memref<2x28x28xf32, #tpu.memory_space<vmem>>, vector<2x24x28xf32>
    %6 = vector.shape_cast %5 : vector<2x24x28xf32> to vector<48x28xf32>
    %c1_7 = arith.constant 1 : index
    %c0_8 = arith.constant 0 : index
    %c0_9 = arith.constant 0 : index
    %7 = vector.load %arg2[%c1_7, %c0_8, %c0_9] : memref<5x28x256xf32, #tpu.memory_space<vmem>>, vector<1x28x256xf32>
    %8 = vector.shape_cast %7 : vector<1x28x256xf32> to vector<28x256xf32>
    %cst_10 = arith.constant dense<0.000000e+00> : vector<48x256xf32>
    %9 = tpu.matmul %6, %8, %cst_10 {dimension_numbers = #tpu.dot_dimension_numbers<[1], [0], [0], [1], [0, 0, 1, 1], [], []>} : vector<48x28xf32>, vector<28x256xf32>, vector<48x256xf32> -> vector<48x256xf32>
    %10 = arith.addf %4, %9 : vector<48x256xf32>
    %c0_11 = arith.constant 0 : index
    %c2 = arith.constant 2 : index
    %c0_12 = arith.constant 0 : index
    %11 = vector.load %arg1[%c0_11, %c2, %c0_12] : memref<2x28x28xf32, #tpu.memory_space<vmem>>, vector<2x24x28xf32>
    %12 = vector.shape_cast %11 : vector<2x24x28xf32> to vector<48x28xf32>
    %c2_13 = arith.constant 2 : index
    %c0_14 = arith.constant 0 : index
    %c0_15 = arith.constant 0 : index
    %13 = vector.load %arg2[%c2_13, %c0_14, %c0_15] : memref<5x28x256xf32, #tpu.memory_space<vmem>>, vector<1x28x256xf32>
    %14 = vector.shape_cast %13 : vector<1x28x256xf32> to vector<28x256xf32>
    %cst_16 = arith.constant dense<0.000000e+00> : vector<48x256xf32>
    %15 = tpu.matmul %12, %14, %cst_16 {dimension_numbers = #tpu.dot_dimension_numbers<[1], [0], [0], [1], [0, 0, 1, 1], [], []>} : vector<48x28xf32>, vector<28x256xf32>, vector<48x256xf32> -> vector<48x256xf32>
    %16 = arith.addf %10, %15 : vector<48x256xf32>
    %c0_17 = arith.constant 0 : index
    %c3 = arith.constant 3 : index
    %c0_18 = arith.constant 0 : index
    %17 = vector.load %arg1[%c0_17, %c3, %c0_18] : memref<2x28x28xf32, #tpu.memory_space<vmem>>, vector<2x24x28xf32>
    %18 = vector.shape_cast %17 : vector<2x24x28xf32> to vector<48x28xf32>
    %c3_19 = arith.constant 3 : index
    %c0_20 = arith.constant 0 : index
    %c0_21 = arith.constant 0 : index
    %19 = vector.load %arg2[%c3_19, %c0_20, %c0_21] : memref<5x28x256xf32, #tpu.memory_space<vmem>>, vector<1x28x256xf32>
    %20 = vector.shape_cast %19 : vector<1x28x256xf32> to vector<28x256xf32>
    %cst_22 = arith.constant dense<0.000000e+00> : vector<48x256xf32>
    %21 = tpu.matmul %18, %20, %cst_22 {dimension_numbers = #tpu.dot_dimension_numbers<[1], [0], [0], [1], [0, 0, 1, 1], [], []>} : vector<48x28xf32>, vector<28x256xf32>, vector<48x256xf32> -> vector<48x256xf32>
    %22 = arith.addf %16, %21 : vector<48x256xf32>
    %c0_23 = arith.constant 0 : index
    %c4 = arith.constant 4 : index
    %c0_24 = arith.constant 0 : index
    %23 = vector.load %arg1[%c0_23, %c4, %c0_24] : memref<2x28x28xf32, #tpu.memory_space<vmem>>, vector<2x24x28xf32>
    %24 = vector.shape_cast %23 : vector<2x24x28xf32> to vector<48x28xf32>
    %c4_25 = arith.constant 4 : index
    %c0_26 = arith.constant 0 : index
    %c0_27 = arith.constant 0 : index
    %25 = vector.load %arg2[%c4_25, %c0_26, %c0_27] : memref<5x28x256xf32, #tpu.memory_space<vmem>>, vector<1x28x256xf32>
    %26 = vector.shape_cast %25 : vector<1x28x256xf32> to vector<28x256xf32>
    %cst_28 = arith.constant dense<0.000000e+00> : vector<48x256xf32>
    %27 = tpu.matmul %24, %26, %cst_28 {dimension_numbers = #tpu.dot_dimension_numbers<[1], [0], [0], [1], [0, 0, 1, 1], [], []>} : vector<48x28xf32>, vector<28x256xf32>, vector<48x256xf32> -> vector<48x256xf32>
    %28 = arith.addf %22, %27 : vector<48x256xf32>
    %29 = vector.extract_strided_slice %28 {offsets = [0, 0], sizes = [48, 128], strides = [1, 1]} : vector<48x256xf32> to vector<48x128xf32>
    %30 = vector.extract_strided_slice %28 {offsets = [0, 128], sizes = [48, 128], strides = [1, 1]} : vector<48x256xf32> to vector<48x128xf32>
    %31 = arith.maximumf %29, %30 : vector<48x128xf32>
    %32 = vector.shape_cast %31 : vector<48x128xf32> to vector<2x24x128xf32>
    %c0_29 = arith.constant 0 : index
    %c0_30 = arith.constant 0 : index
    %c0_31 = arith.constant 0 : index
    %33 = vector.load %arg13[%c0_29, %c0_30, %c0_31] : memref<2x24x128xf32, #tpu.memory_space<vmem>>, vector<2x24x128xf32>
    tpu.vector_store %arg13[%c0_29, %c0_30, %c0_31], %32 {strides = array<i32>} : memref<2x24x128xf32, #tpu.memory_space<vmem>>, vector<2x24x128xf32>,
    %c0_32 = arith.constant 0 : index
    %c0_33 = arith.constant 0 : index
    %c0_34 = arith.constant 0 : index
    %34 = tpu.strided_load %arg13[%c0_32, %c0_33, %c0_34] {strides = array<i32: 1, 2, 1>} : memref<2x24x128xf32, #tpu.memory_space<vmem>>, vector<2x12x128xf32>
    %c0_35 = arith.constant 0 : index
    %c1_36 = arith.constant 1 : index
    %c0_37 = arith.constant 0 : index
    %35 = tpu.strided_load %arg13[%c0_35, %c1_36, %c0_37] {strides = array<i32: 1, 2, 1>} : memref<2x24x128xf32, #tpu.memory_space<vmem>>, vector<2x12x128xf32>
    %36 = arith.maximumf %34, %35 : vector<2x12x128xf32>
    %c0_38 = arith.constant 0 : index
    %c0_39 = arith.constant 0 : index
    %37 = vector.load %arg3[%c0_38, %c0_39] : memref<1x128xf32, #tpu.memory_space<vmem>>, vector<1x128xf32>
    %38 = vector.shape_cast %37 : vector<1x128xf32> to vector<1x1x128xf32>
    %39 = vector.broadcast %38 : vector<1x1x128xf32> to vector<2x12x128xf32>
    %40 = arith.addf %36, %39 : vector<2x12x128xf32>
    %cst_40 = arith.constant 0.000000e+00 : f32
    %41 = vector.broadcast %cst_40 : f32 to vector<2x12x128xf32>
    %42 = arith.maximumf %40, %41 : vector<2x12x128xf32>
    %c0_41 = arith.constant 0 : index
    %c0_42 = arith.constant 0 : index
    %c0_43 = arith.constant 0 : index
    %43 = vector.load %arg14[%c0_41, %c0_42, %c0_43] : memref<2x12x128xf32, #tpu.memory_space<vmem>>, vector<2x12x128xf32>
    tpu.vector_store %arg14[%c0_41, %c0_42, %c0_43], %42 {strides = array<i32>} : memref<2x12x128xf32, #tpu.memory_space<vmem>>, vector<2x12x128xf32>,
    %c0_44 = arith.constant 0 : index
    %c0_45 = arith.constant 0 : index
    %c0_46 = arith.constant 0 : index
    %44 = vector.load %arg14[%c0_44, %c0_45, %c0_46] : memref<2x12x128xf32, #tpu.memory_space<vmem>>, vector<2x8x128xf32>
    %45 = vector.shape_cast %44 : vector<2x8x128xf32> to vector<16x128xf32>
    %c0_47 = arith.constant 0 : index
    %c0_48 = arith.constant 0 : index
    %c0_49 = arith.constant 0 : index
    %46 = vector.load %arg4[%c0_47, %c0_48, %c0_49] : memref<5x128x256xf32, #tpu.memory_space<vmem>>, vector<1x128x256xf32>
    %47 = vector.shape_cast %46 : vector<1x128x256xf32> to vector<128x256xf32>
    %cst_50 = arith.constant dense<0.000000e+00> : vector<16x256xf32>
    %48 = tpu.matmul %45, %47, %cst_50 {dimension_numbers = #tpu.dot_dimension_numbers<[1], [0], [0], [1], [0, 0, 1, 1], [], []>} : vector<16x128xf32>, vector<128x256xf32>, vector<16x256xf32> -> vector<16x256xf32>
    %c0_51 = arith.constant 0 : index
    %c1_52 = arith.constant 1 : index
    %c0_53 = arith.constant 0 : index
    %49 = vector.load %arg14[%c0_51, %c1_52, %c0_53] : memref<2x12x128xf32, #tpu.memory_space<vmem>>, vector<2x8x128xf32>
    %50 = vector.shape_cast %49 : vector<2x8x128xf32> to vector<16x128xf32>
    %c1_54 = arith.constant 1 : index
    %c0_55 = arith.constant 0 : index
    %c0_56 = arith.constant 0 : index
    %51 = vector.load %arg4[%c1_54, %c0_55, %c0_56] : memref<5x128x256xf32, #tpu.memory_space<vmem>>, vector<1x128x256xf32>
    %52 = vector.shape_cast %51 : vector<1x128x256xf32> to vector<128x256xf32>
    %cst_57 = arith.constant dense<0.000000e+00> : vector<16x256xf32>
    %53 = tpu.matmul %50, %52, %cst_57 {dimension_numbers = #tpu.dot_dimension_numbers<[1], [0], [0], [1], [0, 0, 1, 1], [], []>} : vector<16x128xf32>, vector<128x256xf32>, vector<16x256xf32> -> vector<16x256xf32>
    %54 = arith.addf %48, %53 : vector<16x256xf32>
    %c0_58 = arith.constant 0 : index
    %c2_59 = arith.constant 2 : index
    %c0_60 = arith.constant 0 : index
    %55 = vector.load %arg14[%c0_58, %c2_59, %c0_60] : memref<2x12x128xf32, #tpu.memory_space<vmem>>, vector<2x8x128xf32>
    %56 = vector.shape_cast %55 : vector<2x8x128xf32> to vector<16x128xf32>
    %c2_61 = arith.constant 2 : index
    %c0_62 = arith.constant 0 : index
    %c0_63 = arith.constant 0 : index
    %57 = vector.load %arg4[%c2_61, %c0_62, %c0_63] : memref<5x128x256xf32, #tpu.memory_space<vmem>>, vector<1x128x256xf32>
    %58 = vector.shape_cast %57 : vector<1x128x256xf32> to vector<128x256xf32>
    %cst_64 = arith.constant dense<0.000000e+00> : vector<16x256xf32>
    %59 = tpu.matmul %56, %58, %cst_64 {dimension_numbers = #tpu.dot_dimension_numbers<[1], [0], [0], [1], [0, 0, 1, 1], [], []>} : vector<16x128xf32>, vector<128x256xf32>, vector<16x256xf32> -> vector<16x256xf32>
    %60 = arith.addf %54, %59 : vector<16x256xf32>
    %c0_65 = arith.constant 0 : index
    %c3_66 = arith.constant 3 : index
    %c0_67 = arith.constant 0 : index
    %61 = vector.load %arg14[%c0_65, %c3_66, %c0_67] : memref<2x12x128xf32, #tpu.memory_space<vmem>>, vector<2x8x128xf32>
    %62 = vector.shape_cast %61 : vector<2x8x128xf32> to vector<16x128xf32>
    %c3_68 = arith.constant 3 : index
    %c0_69 = arith.constant 0 : index
    %c0_70 = arith.constant 0 : index
    %63 = vector.load %arg4[%c3_68, %c0_69, %c0_70] : memref<5x128x256xf32, #tpu.memory_space<vmem>>, vector<1x128x256xf32>
    %64 = vector.shape_cast %63 : vector<1x128x256xf32> to vector<128x256xf32>
    %cst_71 = arith.constant dense<0.000000e+00> : vector<16x256xf32>
    %65 = tpu.matmul %62, %64, %cst_71 {dimension_numbers = #tpu.dot_dimension_numbers<[1], [0], [0], [1], [0, 0, 1, 1], [], []>} : vector<16x128xf32>, vector<128x256xf32>, vector<16x256xf32> -> vector<16x256xf32>
    %66 = arith.addf %60, %65 : vector<16x256xf32>
    %c0_72 = arith.constant 0 : index
    %c4_73 = arith.constant 4 : index
    %c0_74 = arith.constant 0 : index
    %67 = vector.load %arg14[%c0_72, %c4_73, %c0_74] : memref<2x12x128xf32, #tpu.memory_space<vmem>>, vector<2x8x128xf32>
    %68 = vector.shape_cast %67 : vector<2x8x128xf32> to vector<16x128xf32>
    %c4_75 = arith.constant 4 : index
    %c0_76 = arith.constant 0 : index
    %c0_77 = arith.constant 0 : index
    %69 = vector.load %arg4[%c4_75, %c0_76, %c0_77] : memref<5x128x256xf32, #tpu.memory_space<vmem>>, vector<1x128x256xf32>
    %70 = vector.shape_cast %69 : vector<1x128x256xf32> to vector<128x256xf32>
    %cst_78 = arith.constant dense<0.000000e+00> : vector<16x256xf32>
    %71 = tpu.matmul %68, %70, %cst_78 {dimension_numbers = #tpu.dot_dimension_numbers<[1], [0], [0], [1], [0, 0, 1, 1], [], []>} : vector<16x128xf32>, vector<128x256xf32>, vector<16x256xf32> -> vector<16x256xf32>
    %72 = arith.addf %66, %71 : vector<16x256xf32>
    %73 = vector.extract_strided_slice %72 {offsets = [0, 0], sizes = [16, 128], strides = [1, 1]} : vector<16x256xf32> to vector<16x128xf32>
    %74 = vector.extract_strided_slice %72 {offsets = [0, 128], sizes = [16, 128], strides = [1, 1]} : vector<16x256xf32> to vector<16x128xf32>
    %75 = arith.maximumf %73, %74 : vector<16x128xf32>
    %c0_79 = arith.constant 0 : index
    %c0_80 = arith.constant 0 : index
    %76 = vector.load %arg15[%c0_79, %c0_80] : memref<16x128xf32, #tpu.memory_space<vmem>>, vector<16x128xf32>
    tpu.vector_store %arg15[%c0_79, %c0_80], %75 {strides = array<i32>} : memref<16x128xf32, #tpu.memory_space<vmem>>, vector<16x128xf32>,
    %cst_81 = arith.constant 0.000000e+00 : f32
    %77 = vector.broadcast %cst_81 : f32 to vector<2x128xf32>
    %c0_82 = arith.constant 0 : index
    %c0_83 = arith.constant 0 : index
    %78 = tpu.strided_load %arg15[%c0_82, %c0_83] {strides = array<i32: 8, 1>} : memref<16x128xf32, #tpu.memory_space<vmem>>, vector<2x128xf32>
    %c1_84 = arith.constant 1 : index
    %c0_85 = arith.constant 0 : index
    %79 = tpu.strided_load %arg15[%c1_84, %c0_85] {strides = array<i32: 8, 1>} : memref<16x128xf32, #tpu.memory_space<vmem>>, vector<2x128xf32>
    %80 = arith.maximumf %78, %79 : vector<2x128xf32>
    %c0_86 = arith.constant 0 : index
    %c0_87 = arith.constant 0 : index
    %81 = vector.load %arg5[%c0_86, %c0_87] : memref<1x128xf32, #tpu.memory_space<vmem>>, vector<1x128xf32>
    %82 = vector.broadcast %81 : vector<1x128xf32> to vector<2x128xf32>
    %83 = arith.addf %80, %82 : vector<2x128xf32>
    %cst_88 = arith.constant 0.000000e+00 : f32
    %84 = vector.broadcast %cst_88 : f32 to vector<2x128xf32>
    %85 = arith.maximumf %83, %84 : vector<2x128xf32>
    %c0_89 = arith.constant 0 : index
    %c0_90 = arith.constant 0 : index
    %c0_91 = arith.constant 0 : index
    %86 = vector.load %arg6[%c0_89, %c0_90, %c0_91] : memref<4x128x128xf32, #tpu.memory_space<vmem>>, vector<1x128x128xf32>
    %87 = vector.shape_cast %86 : vector<1x128x128xf32> to vector<128x128xf32>
    %cst_92 = arith.constant dense<0.000000e+00> : vector<2x128xf32>
    %88 = tpu.matmul %85, %87, %cst_92 {dimension_numbers = #tpu.dot_dimension_numbers<[1], [0], [0], [1], [0, 0, 1, 1], [], []>} : vector<2x128xf32>, vector<128x128xf32>, vector<2x128xf32> -> vector<2x128xf32>
    %89 = arith.addf %77, %88 : vector<2x128xf32>
    %c2_93 = arith.constant 2 : index
    %c0_94 = arith.constant 0 : index
    %90 = tpu.strided_load %arg15[%c2_93, %c0_94] {strides = array<i32: 8, 1>} : memref<16x128xf32, #tpu.memory_space<vmem>>, vector<2x128xf32>
    %c3_95 = arith.constant 3 : index
    %c0_96 = arith.constant 0 : index
    %91 = tpu.strided_load %arg15[%c3_95, %c0_96] {strides = array<i32: 8, 1>} : memref<16x128xf32, #tpu.memory_space<vmem>>, vector<2x128xf32>
    %92 = arith.maximumf %90, %91 : vector<2x128xf32>
    %c0_97 = arith.constant 0 : index
    %c0_98 = arith.constant 0 : index
    %93 = vector.load %arg5[%c0_97, %c0_98] : memref<1x128xf32, #tpu.memory_space<vmem>>, vector<1x128xf32>
    %94 = vector.broadcast %93 : vector<1x128xf32> to vector<2x128xf32>
    %95 = arith.addf %92, %94 : vector<2x128xf32>
    %cst_99 = arith.constant 0.000000e+00 : f32
    %96 = vector.broadcast %cst_99 : f32 to vector<2x128xf32>
    %97 = arith.maximumf %95, %96 : vector<2x128xf32>
    %c1_100 = arith.constant 1 : index
    %c0_101 = arith.constant 0 : index
    %c0_102 = arith.constant 0 : index
    %98 = vector.load %arg6[%c1_100, %c0_101, %c0_102] : memref<4x128x128xf32, #tpu.memory_space<vmem>>, vector<1x128x128xf32>
    %99 = vector.shape_cast %98 : vector<1x128x128xf32> to vector<128x128xf32>
    %cst_103 = arith.constant dense<0.000000e+00> : vector<2x128xf32>
    %100 = tpu.matmul %97, %99, %cst_103 {dimension_numbers = #tpu.dot_dimension_numbers<[1], [0], [0], [1], [0, 0, 1, 1], [], []>} : vector<2x128xf32>, vector<128x128xf32>, vector<2x128xf32> -> vector<2x128xf32>
    %101 = arith.addf %89, %100 : vector<2x128xf32>
    %c4_104 = arith.constant 4 : index
    %c0_105 = arith.constant 0 : index
    %102 = tpu.strided_load %arg15[%c4_104, %c0_105] {strides = array<i32: 8, 1>} : memref<16x128xf32, #tpu.memory_space<vmem>>, vector<2x128xf32>
    %c5 = arith.constant 5 : index
    %c0_106 = arith.constant 0 : index
    %103 = tpu.strided_load %arg15[%c5, %c0_106] {strides = array<i32: 8, 1>} : memref<16x128xf32, #tpu.memory_space<vmem>>, vector<2x128xf32>
    %104 = arith.maximumf %102, %103 : vector<2x128xf32>
    %c0_107 = arith.constant 0 : index
    %c0_108 = arith.constant 0 : index
    %105 = vector.load %arg5[%c0_107, %c0_108] : memref<1x128xf32, #tpu.memory_space<vmem>>, vector<1x128xf32>
    %106 = vector.broadcast %105 : vector<1x128xf32> to vector<2x128xf32>
    %107 = arith.addf %104, %106 : vector<2x128xf32>
    %cst_109 = arith.constant 0.000000e+00 : f32
    %108 = vector.broadcast %cst_109 : f32 to vector<2x128xf32>
    %109 = arith.maximumf %107, %108 : vector<2x128xf32>
    %c2_110 = arith.constant 2 : index
    %c0_111 = arith.constant 0 : index
    %c0_112 = arith.constant 0 : index
    %110 = vector.load %arg6[%c2_110, %c0_111, %c0_112] : memref<4x128x128xf32, #tpu.memory_space<vmem>>, vector<1x128x128xf32>
    %111 = vector.shape_cast %110 : vector<1x128x128xf32> to vector<128x128xf32>
    %cst_113 = arith.constant dense<0.000000e+00> : vector<2x128xf32>
    %112 = tpu.matmul %109, %111, %cst_113 {dimension_numbers = #tpu.dot_dimension_numbers<[1], [0], [0], [1], [0, 0, 1, 1], [], []>} : vector<2x128xf32>, vector<128x128xf32>, vector<2x128xf32> -> vector<2x128xf32>
    %113 = arith.addf %101, %112 : vector<2x128xf32>
    %c6 = arith.constant 6 : index
    %c0_114 = arith.constant 0 : index
    %114 = tpu.strided_load %arg15[%c6, %c0_114] {strides = array<i32: 8, 1>} : memref<16x128xf32, #tpu.memory_space<vmem>>, vector<2x128xf32>
    %c7 = arith.constant 7 : index
    %c0_115 = arith.constant 0 : index
    %115 = tpu.strided_load %arg15[%c7, %c0_115] {strides = array<i32: 8, 1>} : memref<16x128xf32, #tpu.memory_space<vmem>>, vector<2x128xf32>
    %116 = arith.maximumf %114, %115 : vector<2x128xf32>
    %c0_116 = arith.constant 0 : index
    %c0_117 = arith.constant 0 : index
    %117 = vector.load %arg5[%c0_116, %c0_117] : memref<1x128xf32, #tpu.memory_space<vmem>>, vector<1x128xf32>
    %118 = vector.broadcast %117 : vector<1x128xf32> to vector<2x128xf32>
    %119 = arith.addf %116, %118 : vector<2x128xf32>
    %cst_118 = arith.constant 0.000000e+00 : f32
    %120 = vector.broadcast %cst_118 : f32 to vector<2x128xf32>
    %121 = arith.maximumf %119, %120 : vector<2x128xf32>
    %c3_119 = arith.constant 3 : index
    %c0_120 = arith.constant 0 : index
    %c0_121 = arith.constant 0 : index
    %122 = vector.load %arg6[%c3_119, %c0_120, %c0_121] : memref<4x128x128xf32, #tpu.memory_space<vmem>>, vector<1x128x128xf32>
    %123 = vector.shape_cast %122 : vector<1x128x128xf32> to vector<128x128xf32>
    %cst_122 = arith.constant dense<0.000000e+00> : vector<2x128xf32>
    %124 = tpu.matmul %121, %123, %cst_122 {dimension_numbers = #tpu.dot_dimension_numbers<[1], [0], [0], [1], [0, 0, 1, 1], [], []>} : vector<2x128xf32>, vector<128x128xf32>, vector<2x128xf32> -> vector<2x128xf32>
    %125 = arith.addf %113, %124 : vector<2x128xf32>
    %c0_123 = arith.constant 0 : index
    %c0_124 = arith.constant 0 : index
    %126 = vector.load %arg7[%c0_123, %c0_124] : memref<1x128xf32, #tpu.memory_space<vmem>>, vector<1x128xf32>
    %127 = vector.broadcast %126 : vector<1x128xf32> to vector<2x128xf32>
    %128 = arith.addf %125, %127 : vector<2x128xf32>
    %cst_125 = arith.constant 0.000000e+00 : f32
    %129 = vector.broadcast %cst_125 : f32 to vector<2x128xf32>
    %130 = arith.maximumf %128, %129 : vector<2x128xf32>
    %c0_126 = arith.constant 0 : index
    %c0_127 = arith.constant 0 : index
    %131 = vector.load %arg8[%c0_126, %c0_127] : memref<128x128xf32, #tpu.memory_space<vmem>>, vector<128x128xf32>
    %cst_128 = arith.constant dense<0.000000e+00> : vector<2x128xf32>
    %132 = tpu.matmul %130, %131, %cst_128 {dimension_numbers = #tpu.dot_dimension_numbers<[1], [0], [0], [1], [0, 0, 1, 1], [], []>} : vector<2x128xf32>, vector<128x128xf32>, vector<2x128xf32> -> vector<2x128xf32>
    %c0_129 = arith.constant 0 : index
    %c0_130 = arith.constant 0 : index
    %133 = vector.load %arg9[%c0_129, %c0_130] : memref<1x128xf32, #tpu.memory_space<vmem>>, vector<1x128xf32>
    %134 = vector.broadcast %133 : vector<1x128xf32> to vector<2x128xf32>
    %135 = arith.addf %132, %134 : vector<2x128xf32>
    %cst_131 = arith.constant 0.000000e+00 : f32
    %136 = vector.broadcast %cst_131 : f32 to vector<2x128xf32>
    %137 = arith.maximumf %135, %136 : vector<2x128xf32>
    %c0_132 = arith.constant 0 : index
    %c0_133 = arith.constant 0 : index
    %138 = vector.load %arg10[%c0_132, %c0_133] : memref<128x128xf32, #tpu.memory_space<vmem>>, vector<128x128xf32>
    %cst_134 = arith.constant dense<0.000000e+00> : vector<2x128xf32>
    %139 = tpu.matmul %137, %138, %cst_134 {dimension_numbers = #tpu.dot_dimension_numbers<[1], [0], [0], [1], [0, 0, 1, 1], [], []>} : vector<2x128xf32>, vector<128x128xf32>, vector<2x128xf32> -> vector<2x128xf32>
    %c0_135 = arith.constant 0 : index
    %c0_136 = arith.constant 0 : index
    %140 = vector.load %arg11[%c0_135, %c0_136] : memref<1x128xf32, #tpu.memory_space<vmem>>, vector<1x128xf32>
    %141 = vector.broadcast %140 : vector<1x128xf32> to vector<2x128xf32>
    %142 = arith.addf %139, %141 : vector<2x128xf32>
    %c0_137 = arith.constant 0 : index
    %c0_138 = arith.constant 0 : index
    %143 = vector.load %arg12[%c0_137, %c0_138] : memref<2x128xf32, #tpu.memory_space<vmem>>, vector<2x128xf32>
    tpu.vector_store %arg12[%c0_137, %c0_138], %142 {strides = array<i32>} : memref<2x128xf32, #tpu.memory_space<vmem>>, vector<2x128xf32>,
    return
  }
  func.func @transform_0(%arg0: i32) -> (i32, i32, i32) {
    %c0_i32 = arith.constant 0 : i32
    %c0_i32_0 = arith.constant 0 : i32
    %c0_i32_1 = arith.constant 0 : i32
    return %arg0, %c0_i32, %c0_i32_0 : i32, i32, i32
  }
  func.func @transform_1(%arg0: i32) -> (i32, i32, i32) {
    %c0_i32 = arith.constant 0 : i32
    %c0_i32_0 = arith.constant 0 : i32
    %c0_i32_1 = arith.constant 0 : i32
    %c0_i32_2 = arith.constant 0 : i32
    return %c0_i32, %c0_i32_0, %c0_i32_1 : i32, i32, i32
  }
  func.func @transform_2(%arg0: i32) -> (i32, i32) {
    %c0_i32 = arith.constant 0 : i32
    %c0_i32_0 = arith.constant 0 : i32
    %c0_i32_1 = arith.constant 0 : i32
    return %c0_i32, %c0_i32_0 : i32, i32
  }
  func.func @transform_3(%arg0: i32) -> (i32, i32, i32) {
    %c0_i32 = arith.constant 0 : i32
    %c0_i32_0 = arith.constant 0 : i32
    %c0_i32_1 = arith.constant 0 : i32
    %c0_i32_2 = arith.constant 0 : i32
    return %c0_i32, %c0_i32_0, %c0_i32_1 : i32, i32, i32
  }
  func.func @transform_4(%arg0: i32) -> (i32, i32) {
    %c0_i32 = arith.constant 0 : i32
    %c0_i32_0 = arith.constant 0 : i32
    %c0_i32_1 = arith.constant 0 : i32
    return %c0_i32, %c0_i32_0 : i32, i32
  }
  func.func @transform_5(%arg0: i32) -> (i32, i32, i32) {
    %c0_i32 = arith.constant 0 : i32
    %c0_i32_0 = arith.constant 0 : i32
    %c0_i32_1 = arith.constant 0 : i32
    %c0_i32_2 = arith.constant 0 : i32
    return %c0_i32, %c0_i32_0, %c0_i32_1 : i32, i32, i32
  }
  func.func @transform_6(%arg0: i32) -> (i32, i32) {
    %c0_i32 = arith.constant 0 : i32
    %c0_i32_0 = arith.constant 0 : i32
    %c0_i32_1 = arith.constant 0 : i32
    return %c0_i32, %c0_i32_0 : i32, i32
  }
  func.func @transform_7(%arg0: i32) -> (i32, i32) {
    %c0_i32 = arith.constant 0 : i32
    %c0_i32_0 = arith.constant 0 : i32
    %c0_i32_1 = arith.constant 0 : i32
    return %c0_i32, %c0_i32_0 : i32, i32
  }
  func.func @transform_8(%arg0: i32) -> (i32, i32) {
    %c0_i32 = arith.constant 0 : i32
    %c0_i32_0 = arith.constant 0 : i32
    %c0_i32_1 = arith.constant 0 : i32
    return %c0_i32, %c0_i32_0 : i32, i32
  }
  func.func @transform_9(%arg0: i32) -> (i32, i32) {
    %c0_i32 = arith.constant 0 : i32
    %c0_i32_0 = arith.constant 0 : i32
    %c0_i32_1 = arith.constant 0 : i32
    return %c0_i32, %c0_i32_0 : i32, i32
  }
  func.func @transform_10(%arg0: i32) -> (i32, i32) {
    %c0_i32 = arith.constant 0 : i32
    %c0_i32_0 = arith.constant 0 : i32
    %c0_i32_1 = arith.constant 0 : i32
    return %c0_i32, %c0_i32_0 : i32, i32
  }
  func.func @transform_11(%arg0: i32) -> (i32, i32) {
    %c0_i32 = arith.constant 0 : i32
    %c0_i32_0 = arith.constant 0 : i32
    return %arg0, %c0_i32 : i32, i32
  }
}

</mosaic_0001>

<llo_original>
// kernel: convnet_forward.1
$region0: #{convnet_forward.1}
  #allocation0 [shape = 'u32[]', space=smem, size = 0x4, offset = 0x4, fixed_abs, tag = 'smem constant byte address 0x4 - core index']
  #allocation1 [shape = 'u32[72,128]{1,0:T(1,128)}', space=vmem, size = 0x9000, scoped, tag = 'internal scratch']
  #allocation2 [shape = 'f32[2,24,128]{2,1,0:T(8,128)}', space=vmem, size = 0x6000, scoped, tag = 'scratch operand']
  #allocation3 [shape = 'f32[2,12,128]{2,1,0:T(8,128)}', space=vmem, size = 0x4000, scoped, tag = 'scratch operand']
  #allocation4 [shape = 'f32[16,128]{1,0:T(8,128)}', space=vmem, size = 0x2000, scoped, tag = 'scratch operand']
  %s0 = inlined_call_operand.vmem [shape: f32[2,28,28], index: 0, kind: input, shape index: {}]
  %s1 = inlined_call_operand.hbm [shape: f32[5,28,256], index: 1, kind: input, shape index: {}]
  %s2 = inlined_call_operand.vmem [shape: f32[1,128], index: 2, kind: input, shape index: {}]
  %s3 = inlined_call_operand.hbm [shape: f32[5,128,256], index: 3, kind: input, shape index: {}]
  %s4 = inlined_call_operand.vmem [shape: f32[1,128], index: 4, kind: input, shape index: {}]
  %s5 = inlined_call_operand.hbm [shape: f32[4,128,128], index: 5, kind: input, shape index: {}]
  %s6 = inlined_call_operand.vmem [shape: f32[1,128], index: 6, kind: input, shape index: {}]
  %s7 = inlined_call_operand.vmem [shape: f32[128,128], index: 7, kind: input, shape index: {}]
  %s8 = inlined_call_operand.vmem [shape: f32[1,128], index: 8, kind: input, shape index: {}]
  %s9 = inlined_call_operand.hbm [shape: f32[128,128], index: 9, kind: input, shape index: {}]
  %s10 = inlined_call_operand.vmem [shape: f32[1,128], index: 10, kind: input, shape index: {}]
  %s11 = inlined_call_operand.hbm [shape: f32[2,128], index: 11, kind: output, shape index: {}]
  %s12 = sld [smem:[#allocation0]]
  $region70: #{convnet_forward.1} parent=0
    _
  %s14 = ssub.s32 1, %s12
  %s15 = scalar_select 0, %s14, %s12
  $region1: #{convnet_forward.1} parent=0
    #allocation5 [shape = 'u8[163840]{0}', space=vmem, size = 0x28000, scoped, tag = 'input window, operand 1, single buffered']
    #allocation6 [shape = 's32[1]{0}', space=sflag, size = 0x4, scoped, tag = 'scoped memory for convnet_forward.1']
    #allocation7 [shape = 's32[1]{0}', space=sflag, size = 0x4, scoped, tag = 'scoped memory for convnet_forward.1']
    #allocation8 [shape = 'u8[655360]{0}', space=vmem, size = 0xa0000, scoped, tag = 'input window, operand 3, single buffered']
    #allocation9 [shape = 's32[1]{0}', space=sflag, size = 0x4, scoped, tag = 'scoped memory for convnet_forward.1']
    #allocation10 [shape = 'u8[262144]{0}', space=vmem, size = 0x40000, scoped, tag = 'input window, operand 5, single buffered']
    #allocation11 [shape = 'u8[65536]{0}', space=vmem, size = 0x10000, scoped, tag = 'input window, operand 9, single buffered']
    #allocation12 [shape = 's32[1]{0}', space=sflag, size = 0x4, scoped, tag = 'scoped memory for convnet_forward.1']
    #allocation13 [shape = 'u8[1024]{0}', space=vmem, size = 0x400, scoped, tag = 'output window, operand 0, single buffered']
    %16 = vsyncpa [#allocation6], 0
    %17 = vsyncpa [#allocation9], 0
    %18 = vsyncpa [#allocation12], 0
    %19 = vsyncpa [#allocation7], 0
    // Predicated region
    $region2: #{convnet_forward.1} parent=1 // pred_check
      _
    $region3: #{convnet_forward.1} parent=1 // pred_check_branch
      %21 = sbr.rel (0) target = $region5
    $region4: #{convnet_forward.1} parent=1 // pred_region
      _
    $region5: #{convnet_forward.1} parent=1 // pred_fallthru
      _
    // Predicated region
    $region6: #{convnet_forward.1} parent=1 // pred_check
      _
    $region7: #{convnet_forward.1} parent=1 // pred_check_branch
      %23 = sbr.rel (0) target = $region9
    $region8: #{convnet_forward.1} parent=1 // pred_region
      %25 = vsyncadd [#allocation6], 0
      %s26 = sshll.u32 %s1, 4
      %s27 = int_to_ptr.hbm [resolvable:$true] %s26
      %s28 = sshll.u32 [#allocation5], 4
      %s29 = int_to_ptr.vmem [resolvable:$true] %s28
      %34 = dma.hbm_to_vmem [thread:$0]  %s27, 5120, %s29, [#allocation6], 256, 256, 16
    $region9: #{convnet_forward.1} parent=1 // pred_fallthru
      _
    // Predicated region
    $region10: #{convnet_forward.1} parent=1 // pred_check
      _
    $region11: #{convnet_forward.1} parent=1 // pred_check_branch
      %36 = sbr.rel (0) target = $region13
    $region12: #{convnet_forward.1} parent=1 // pred_region
      _
    $region13: #{convnet_forward.1} parent=1 // pred_fallthru
      _
    // Predicated region
    $region14: #{convnet_forward.1} parent=1 // pred_check
      _
    $region15: #{convnet_forward.1} parent=1 // pred_check_branch
      %38 = sbr.rel (0) target = $region17
    $region16: #{convnet_forward.1} parent=1 // pred_region
      %40 = vsyncadd [#allocation9], 0
      %s41 = sshll.u32 %s3, 4
      %s42 = int_to_ptr.hbm [resolvable:$true] %s41
      %s43 = sshll.u32 [#allocation8], 4
      %s44 = int_to_ptr.vmem [resolvable:$true] %s43
      %49 = dma.hbm_to_vmem [thread:$0]  %s42, 20480, %s44, [#allocation9], 256, 256, 16
    $region17: #{convnet_forward.1} parent=1 // pred_fallthru
      _
    // Predicated region
    $region18: #{convnet_forward.1} parent=1 // pred_check
      _
    $region19: #{convnet_forward.1} parent=1 // pred_check_branch
      %51 = sbr.rel (0) target = $region21
    $region20: #{convnet_forward.1} parent=1 // pred_region
      _
    $region21: #{convnet_forward.1} parent=1 // pred_fallthru
      _
    // Predicated region
    $region22: #{convnet_forward.1} parent=1 // pred_check
      _
    $region23: #{convnet_forward.1} parent=1 // pred_check_branch
      %53 = sbr.rel (0) target = $region25
    $region24: #{convnet_forward.1} parent=1 // pred_region
      %55 = vsyncadd [#allocation9], 0
      %s56 = sshll.u32 %s5, 4
      %s57 = int_to_ptr.hbm [resolvable:$true] %s56
      %s58 = sshll.u32 [#allocation10], 4
      %s59 = int_to_ptr.vmem [resolvable:$true] %s58
      %64 = dma.hbm_to_vmem [thread:$0]  %s57, 8192, %s59, [#allocation9], 128, 128, 8
    $region25: #{convnet_forward.1} parent=1 // pred_fallthru
      _
    // Predicated region
    $region26: #{convnet_forward.1} parent=1 // pred_check
      _
    $region27: #{convnet_forward.1} parent=1 // pred_check_branch
      %66 = sbr.rel (0) target = $region29
    $region28: #{convnet_forward.1} parent=1 // pred_region
      _
    $region29: #{convnet_forward.1} parent=1 // pred_fallthru
      _
    // Predicated region
    $region30: #{convnet_forward.1} parent=1 // pred_check
      _
    $region31: #{convnet_forward.1} parent=1 // pred_check_branch
      %68 = sbr.rel (0) target = $region33
    $region32: #{convnet_forward.1} parent=1 // pred_region
      _
    $region33: #{convnet_forward.1} parent=1 // pred_fallthru
      _
    // Predicated region
    $region34: #{convnet_forward.1} parent=1 // pred_check
      _
    $region35: #{convnet_forward.1} parent=1 // pred_check_branch
      %70 = sbr.rel (0) target = $region37
    $region36: #{convnet_forward.1} parent=1 // pred_region
      _
    $region37: #{convnet_forward.1} parent=1 // pred_fallthru
      _
    // Predicated region
    $region38: #{convnet_forward.1} parent=1 // pred_check
      _
    $region39: #{convnet_forward.1} parent=1 // pred_check_branch
      %72 = sbr.rel (0) target = $region41
    $region40: #{convnet_forward.1} parent=1 // pred_region
      %74 = vsyncadd [#allocation12], 0
      %s75 = sshll.u32 %s9, 4
      %s76 = int_to_ptr.hbm [resolvable:$true] %s75
      %s77 = sshll.u32 [#allocation11], 4
      %s78 = int_to_ptr.vmem [resolvable:$true] %s77
      %83 = dma.hbm_to_vmem [thread:$0]  %s76, 2048, %s78, [#allocation12], 128, 128, 8
    $region41: #{convnet_forward.1} parent=1 // pred_fallthru
      _
    // Predicated region
    $region42: #{convnet_forward.1} parent=1 // pred_check
      _
    $region43: #{convnet_forward.1} parent=1 // pred_check_branch
      %85 = sbr.rel (0) target = $region45
    $region44: #{convnet_forward.1} parent=1 // pred_region
      _
    $region45: #{convnet_forward.1} parent=1 // pred_fallthru
      _
    // Predicated region
    $region46: #{convnet_forward.1} parent=1 // pred_check
      _
    $region47: #{convnet_forward.1} parent=1 // pred_check_branch
      %87 = sbr.rel (0) target = $region49
    $region48: #{convnet_forward.1} parent=1 // pred_region
      %89 = dma.done [#allocation6], 5120
    $region49: #{convnet_forward.1} parent=1 // pred_fallthru
      _
    // Predicated region
    $region50: #{convnet_forward.1} parent=1 // pred_check
      _
    $region51: #{convnet_forward.1} parent=1 // pred_check_branch
      %91 = sbr.rel (0) target = $region53
    $region52: #{convnet_forward.1} parent=1 // pred_region
      %93 = dma.done [#allocation9], 20480
    $region53: #{convnet_forward.1} parent=1 // pred_fallthru
      _
    // Predicated region
    $region54: #{convnet_forward.1} parent=1 // pred_check
      _
    $region55: #{convnet_forward.1} parent=1 // pred_check_branch
      %95 = sbr.rel (0) target = $region57
    $region56: #{convnet_forward.1} parent=1 // pred_region
      %97 = dma.done [#allocation9], 8192
    $region57: #{convnet_forward.1} parent=1 // pred_fallthru
      _
    // Predicated region
    $region58: #{convnet_forward.1} parent=1 // pred_check
      _
    $region59: #{convnet_forward.1} parent=1 // pred_check_branch
      %99 = sbr.rel (0) target = $region61
    $region60: #{convnet_forward.1} parent=1 // pred_region
      %101 = dma.done [#allocation12], 2048
    $region61: #{convnet_forward.1} parent=1 // pred_fallthru
      _
    %v102 = vld [vmem:[%s0] sm:$0xff]
    %v103 = vld [vmem:[%s0 + $0x8] sm:$0xff]
    %v104 = vld [vmem:[%s0 + $0x10] sm:$0xff]
    %v105 = vld [vmem:[%s0 + $0x20] sm:$0xff]
    %v106 = vld [vmem:[%s0 + $0x28] sm:$0xff]
    %v107 = vld [vmem:[%s0 + $0x30] sm:$0xff]
    %v108 = vld [vmem:[#allocation5] sm:$0xff]
    %v109 = vld [vmem:[#allocation5 + $0x8] sm:$0xff]
    %v110 = vld [vmem:[#allocation5 + $0x10] sm:$0xff]
    %v111 = vld [vmem:[#allocation5 + $0x18] sm:$0xff]
    %v112 = vld [vmem:[#allocation5 + $0x20] sm:$0xff]
    %v113 = vld [vmem:[#allocation5 + $0x28] sm:$0xff]
    %v114 = vld [vmem:[#allocation5 + $0x30] sm:$0xf]
    %v115 = vld [vmem:[#allocation5 + $0x38] sm:$0xf]
    %v116 = vld [vmem:[%s0 + $0x1] sm:$0xff]
    %v117 = vld [vmem:[%s0 + $0x9] sm:$0xff]
    %v118 = vld [vmem:[%s0 + $0x11] sm:$0xff]
    %v119 = vld [vmem:[%s0 + $0x21] sm:$0xff]
    %v120 = vld [vmem:[%s0 + $0x29] sm:$0xff]
    %v121 = vld [vmem:[%s0 + $0x31] sm:$0xff]
    %s122 = scalar_lea.vmem [#allocation5], 64
    %v123 = vld [vmem:[%s122] sm:$0xff]
    %v124 = vld [vmem:[%s122 + $0x8] sm:$0xff]
    %v125 = vld [vmem:[%s122 + $0x10] sm:$0xff]
    %v126 = vld [vmem:[%s122 + $0x18] sm:$0xff]
    %v127 = vld [vmem:[%s122 + $0x20] sm:$0xff]
    %v128 = vld [vmem:[%s122 + $0x28] sm:$0xff]
    %v129 = vld [vmem:[%s122 + $0x30] sm:$0xf]
    %v130 = vld [vmem:[%s122 + $0x38] sm:$0xf]
    %vm131 = vcmask 228352
    %v133 = vsel %vm131, %v116, 0
    %v136 = vsel %vm131, %v117, 0
    %v139 = vsel %vm131, %v118, 0
    %v142 = vsel %vm131, %v119, 0
    %v145 = vsel %vm131, %v120, 0
    %v148 = vsel %vm131, %v121, 0
    %vm150 = vcmask 1043456
    %v152 = vsel %vm150, %v129, 0
    %v155 = vsel %vm150, %v130, 0
    %157 = vmatpush.msra.mxu0 0.0
    %158 = vmatpush.msra.mxu0 0.0
    %159 = vmatpush.msra.mxu0 0.0
    %160 = vmatpush.msra.mxu0 0.0
    %161 = vmatpush.msra.mxu0 0.0
    %162 = vmatpush.msra.mxu0 0.0
    %163 = vmatpush.msra.mxu0 0.0
    %164 = vmatpush.msra.mxu0 0.0
    %165 = vmatpush.msra.mxu0 0.0
    %166 = vmatpush.msra.mxu0 0.0
    %167 = vmatpush.msra.mxu0 0.0
    %168 = vmatpush.msra.mxu0 0.0
    %169 = vmatpush.msra.mxu0 %v152
    %170 = vmatpush.msra.mxu0 %v127
    %171 = vmatpush.msra.mxu0 %v125
    %172 = vmatpush.msra.mxu0 %v123
    %173 = vmatmul.f32.gmra.mxu0 %v133
    %v174 = vpop.f32.mrf.mxu0
    %v175 = vadd.f32 0.0, %v174
    %176 = vmatmul.f32.gmra.mxu0 %v136
    %v177 = vpop.f32.mrf.mxu0
    %v178 = vadd.f32 0.0, %v177
    %179 = vmatmul.f32.gmra.mxu0 %v139
    %v180 = vpop.f32.mrf.mxu0
    %v181 = vadd.f32 0.0, %v180
    %182 = vmatmul.f32.gmra.mxu0 %v142
    %v183 = vpop.f32.mrf.mxu0
    %v184 = vadd.f32 0.0, %v183
    %185 = vmatmul.f32.gmra.mxu0 %v145
    %v186 = vpop.f32.mrf.mxu0
    %v187 = vadd.f32 0.0, %v186
    %188 = vmatmul.f32.gmra.mxu0 %v148
    %v189 = vpop.f32.mrf.mxu0
    %v190 = vadd.f32 0.0, %v189
    %191 = vdwg.mxu0
    %192 = vmatpush.msra.mxu0 0.0
    %193 = vmatpush.msra.mxu0 0.0
    %194 = vmatpush.msra.mxu0 0.0
    %195 = vmatpush.msra.mxu0 0.0
    %196 = vmatpush.msra.mxu0 0.0
    %197 = vmatpush.msra.mxu0 0.0
    %198 = vmatpush.msra.mxu0 0.0
    %199 = vmatpush.msra.mxu0 0.0
    %200 = vmatpush.msra.mxu0 0.0
    %201 = vmatpush.msra.mxu0 0.0
    %202 = vmatpush.msra.mxu0 0.0
    %203 = vmatpush.msra.mxu0 0.0
    %204 = vmatpush.msra.mxu0 %v155
    %205 = vmatpush.msra.mxu0 %v128
    %206 = vmatpush.msra.mxu0 %v126
    %207 = vmatpush.msra.mxu0 %v124
    %208 = vmatmul.f32.gmra.mxu0 %v133
    %v209 = vpop.f32.mrf.mxu0
    %v210 = vadd.f32 0.0, %v209
    %211 = vmatmul.f32.gmra.mxu0 %v136
    %v212 = vpop.f32.mrf.mxu0
    %v213 = vadd.f32 0.0, %v212
    %214 = vmatmul.f32.gmra.mxu0 %v139
    %v215 = vpop.f32.mrf.mxu0
    %v216 = vadd.f32 0.0, %v215
    %217 = vmatmul.f32.gmra.mxu0 %v142
    %v218 = vpop.f32.mrf.mxu0
    %v219 = vadd.f32 0.0, %v218
    %220 = vmatmul.f32.gmra.mxu0 %v145
    %v221 = vpop.f32.mrf.mxu0
    %v222 = vadd.f32 0.0, %v221
    %223 = vmatmul.f32.gmra.mxu0 %v148
    %v224 = vpop.f32.mrf.mxu0
    %v225 = vadd.f32 0.0, %v224
    %226 = vdwg.mxu0
    %v228 = vsel %vm131, %v102, 0
    %v231 = vsel %vm131, %v103, 0
    %v234 = vsel %vm131, %v104, 0
    %v237 = vsel %vm131, %v105, 0
    %v240 = vsel %vm131, %v106, 0
    %v243 = vsel %vm131, %v107, 0
    %v246 = vsel %vm150, %v114, 0
    %v249 = vsel %vm150, %v115, 0
    %251 = vmatpush.msra.mxu0 0.0
    %252 = vmatpush.msra.mxu0 0.0
    %253 = vmatpush.msra.mxu0 0.0
    %254 = vmatpush.msra.mxu0 0.0
    %255 = vmatpush.msra.mxu0 0.0
    %256 = vmatpush.msra.mxu0 0.0
    %257 = vmatpush.msra.mxu0 0.0
    %258 = vmatpush.msra.mxu0 0.0
    %259 = vmatpush.msra.mxu0 0.0
    %260 = vmatpush.msra.mxu0 0.0
    %261 = vmatpush.msra.mxu0 0.0
    %262 = vmatpush.msra.mxu0 0.0
    %263 = vmatpush.msra.mxu0 %v246
    %264 = vmatpush.msra.mxu0 %v112
    %265 = vmatpush.msra.mxu0 %v110
    %266 = vmatpush.msra.mxu0 %v108
    %267 = vmatmul.f32.gmra.mxu0 %v228
    %v268 = vpop.f32.mrf.mxu0
    %v269 = vadd.f32 %v175, %v268
    %270 = vmatmul.f32.gmra.mxu0 %v231
    %v271 = vpop.f32.mrf.mxu0
    %v272 = vadd.f32 %v178, %v271
    %273 = vmatmul.f32.gmra.mxu0 %v234
    %v274 = vpop.f32.mrf.mxu0
    %v275 = vadd.f32 %v181, %v274
    %276 = vmatmul.f32.gmra.mxu0 %v237
    %v277 = vpop.f32.mrf.mxu0
    %v278 = vadd.f32 %v184, %v277
    %279 = vmatmul.f32.gmra.mxu0 %v240
    %v280 = vpop.f32.mrf.mxu0
    %v281 = vadd.f32 %v187, %v280
    %282 = vmatmul.f32.gmra.mxu0 %v243
    %v283 = vpop.f32.mrf.mxu0
    %v284 = vadd.f32 %v190, %v283
    %285 = vdwg.mxu0
    %286 = vmatpush.msra.mxu0 0.0
    %287 = vmatpush.msra.mxu0 0.0
    %288 = vmatpush.msra.mxu0 0.0
    %289 = vmatpush.msra.mxu0 0.0
    %290 = vmatpush.msra.mxu0 0.0
    %291 = vmatpush.msra.mxu0 0.0
    %292 = vmatpush.msra.mxu0 0.0
    %293 = vmatpush.msra.mxu0 0.0
    %294 = vmatpush.msra.mxu0 0.0
    %295 = vmatpush.msra.mxu0 0.0
    %296 = vmatpush.msra.mxu0 0.0
    %297 = vmatpush.msra.mxu0 0.0
    %298 = vmatpush.msra.mxu0 %v249
    %299 = vmatpush.msra.mxu0 %v113
    %300 = vmatpush.msra.mxu0 %v111
    %301 = vmatpush.msra.mxu0 %v109
    %302 = vmatmul.f32.gmra.mxu0 %v228
    %v303 = vpop.f32.mrf.mxu0
    %v304 = vadd.f32 %v210, %v303
    %305 = vmatmul.f32.gmra.mxu0 %v231
    %v306 = vpop.f32.mrf.mxu0
    %v307 = vadd.f32 %v213, %v306
    %308 = vmatmul.f32.gmra.mxu0 %v234
    %v309 = vpop.f32.mrf.mxu0
    %v310 = vadd.f32 %v216, %v309
    %311 = vmatmul.f32.gmra.mxu0 %v237
    %v312 = vpop.f32.mrf.mxu0
    %v313 = vadd.f32 %v219, %v312
    %314 = vmatmul.f32.gmra.mxu0 %v240
    %v315 = vpop.f32.mrf.mxu0
    %v316 = vadd.f32 %v222, %v315
    %317 = vmatmul.f32.gmra.mxu0 %v243
    %v318 = vpop.f32.mrf.mxu0
    %v319 = vadd.f32 %v225, %v318
    %320 = vdwg.mxu0
    %v321 = vld [vmem:[%s0 + $0x2] sm:$0xff]
    %v322 = vld [vmem:[%s0 + $0xa] sm:$0xff]
    %v323 = vld [vmem:[%s0 + $0x12] sm:$0xff]
    %v324 = vld [vmem:[%s0 + $0x22] sm:$0xff]
    %v325 = vld [vmem:[%s0 + $0x2a] sm:$0xff]
    %v326 = vld [vmem:[%s0 + $0x32] sm:$0xff]
    %s327 = scalar_lea.vmem [#allocation5], 128
    %v328 = vld [vmem:[%s327] sm:$0xff]
    %v329 = vld [vmem:[%s327 + $0x8] sm:$0xff]
    %v330 = vld [vmem:[%s327 + $0x10] sm:$0xff]
    %v331 = vld [vmem:[%s327 + $0x18] sm:$0xff]
    %v332 = vld [vmem:[%s327 + $0x20] sm:$0xff]
    %v333 = vld [vmem:[%s327 + $0x28] sm:$0xff]
    %v334 = vld [vmem:[%s327 + $0x30] sm:$0xf]
    %v335 = vld [vmem:[%s327 + $0x38] sm:$0xf]
    %v337 = vsel %vm131, %v321, 0
    %v340 = vsel %vm131, %v322, 0
    %v343 = vsel %vm131, %v323, 0
    %v346 = vsel %vm131, %v324, 0
    %v349 = vsel %vm131, %v325, 0
    %v352 = vsel %vm131, %v326, 0
    %v355 = vsel %vm150, %v334, 0
    %v358 = vsel %vm150, %v335, 0
    %360 = vmatpush.msra.mxu0 0.0
    %361 = vmatpush.msra.mxu0 0.0
    %362 = vmatpush.msra.mxu0 0.0
    %363 = vmatpush.msra.mxu0 0.0
    %364 = vmatpush.msra.mxu0 0.0
    %365 = vmatpush.msra.mxu0 0.0
    %366 = vmatpush.msra.mxu0 0.0
    %367 = vmatpush.msra.mxu0 0.0
    %368 = vmatpush.msra.mxu0 0.0
    %369 = vmatpush.msra.mxu0 0.0
    %370 = vmatpush.msra.mxu0 0.0
    %371 = vmatpush.msra.mxu0 0.0
    %372 = vmatpush.msra.mxu0 %v355
    %373 = vmatpush.msra.mxu0 %v332
    %374 = vmatpush.msra.mxu0 %v330
    %375 = vmatpush.msra.mxu0 %v328
    %376 = vmatmul.f32.gmra.mxu0 %v337
    %v377 = vpop.f32.mrf.mxu0
    %v378 = vadd.f32 0.0, %v377
    %379 = vmatmul.f32.gmra.mxu0 %v340
    %v380 = vpop.f32.mrf.mxu0
    %v381 = vadd.f32 0.0, %v380
    %382 = vmatmul.f32.gmra.mxu0 %v343
    %v383 = vpop.f32.mrf.mxu0
    %v384 = vadd.f32 0.0, %v383
    %385 = vmatmul.f32.gmra.mxu0 %v346
    %v386 = vpop.f32.mrf.mxu0
    %v387 = vadd.f32 0.0, %v386
    %388 = vmatmul.f32.gmra.mxu0 %v349
    %v389 = vpop.f32.mrf.mxu0
    %v390 = vadd.f32 0.0, %v389
    %391 = vmatmul.f32.gmra.mxu0 %v352
    %v392 = vpop.f32.mrf.mxu0
    %v393 = vadd.f32 0.0, %v392
    %394 = vdwg.mxu0
    %395 = vmatpush.msra.mxu0 0.0
    %396 = vmatpush.msra.mxu0 0.0
    %397 = vmatpush.msra.mxu0 0.0
    %398 = vmatpush.msra.mxu0 0.0
    %399 = vmatpush.msra.mxu0 0.0
    %400 = vmatpush.msra.mxu0 0.0
    %401 = vmatpush.msra.mxu0 0.0
    %402 = vmatpush.msra.mxu0 0.0
    %403 = vmatpush.msra.mxu0 0.0
    %404 = vmatpush.msra.mxu0 0.0
    %405 = vmatpush.msra.mxu0 0.0
    %406 = vmatpush.msra.mxu0 0.0
    %407 = vmatpush.msra.mxu0 %v358
    %408 = vmatpush.msra.mxu0 %v333
    %409 = vmatpush.msra.mxu0 %v331
    %410 = vmatpush.msra.mxu0 %v329
    %411 = vmatmul.f32.gmra.mxu0 %v337
    %v412 = vpop.f32.mrf.mxu0
    %v413 = vadd.f32 0.0, %v412
    %414 = vmatmul.f32.gmra.mxu0 %v340
    %v415 = vpop.f32.mrf.mxu0
    %v416 = vadd.f32 0.0, %v415
    %417 = vmatmul.f32.gmra.mxu0 %v343
    %v418 = vpop.f32.mrf.mxu0
    %v419 = vadd.f32 0.0, %v418
    %420 = vmatmul.f32.gmra.mxu0 %v346
    %v421 = vpop.f32.mrf.mxu0
    %v422 = vadd.f32 0.0, %v421
    %423 = vmatmul.f32.gmra.mxu0 %v349
    %v424 = vpop.f32.mrf.mxu0
    %v425 = vadd.f32 0.0, %v424
    %426 = vmatmul.f32.gmra.mxu0 %v352
    %v427 = vpop.f32.mrf.mxu0
    %v428 = vadd.f32 0.0, %v427
    %429 = vdwg.mxu0
    %v430 = vadd.f32 %v269, %v378
    %v431 = vadd.f32 %v304, %v413
    %v432 = vadd.f32 %v272, %v381
    %v433 = vadd.f32 %v307, %v416
    %v434 = vadd.f32 %v275, %v384
    %v435 = vadd.f32 %v310, %v419
    %v436 = vadd.f32 %v278, %v387
    %v437 = vadd.f32 %v313, %v422
    %v438 = vadd.f32 %v281, %v390
    %v439 = vadd.f32 %v316, %v425
    %v440 = vadd.f32 %v284, %v393
    %v441 = vadd.f32 %v319, %v428
    %v442 = vld [vmem:[%s0 + $0x3] sm:$0xff]
    %v443 = vld [vmem:[%s0 + $0xb] sm:$0xff]
    %v444 = vld [vmem:[%s0 + $0x13] sm:$0xff]
    %v445 = vld [vmem:[%s0 + $0x23] sm:$0xff]
    %v446 = vld [vmem:[%s0 + $0x2b] sm:$0xff]
    %v447 = vld [vmem:[%s0 + $0x33] sm:$0xff]
    %s448 = scalar_lea.vmem [#allocation5], 192
    %v449 = vld [vmem:[%s448] sm:$0xff]
    %v450 = vld [vmem:[%s448 + $0x8] sm:$0xff]
    %v451 = vld [vmem:[%s448 + $0x10] sm:$0xff]
    %v452 = vld [vmem:[%s448 + $0x18] sm:$0xff]
    %v453 = vld [vmem:[%s448 + $0x20] sm:$0xff]
    %v454 = vld [vmem:[%s448 + $0x28] sm:$0xff]
    %v455 = vld [vmem:[%s448 + $0x30] sm:$0xf]
    %v456 = vld [vmem:[%s448 + $0x38] sm:$0xf]
    %v458 = vsel %vm131, %v442, 0
    %v461 = vsel %vm131, %v443, 0
    %v464 = vsel %vm131, %v444, 0
    %v467 = vsel %vm131, %v445, 0
    %v470 = vsel %vm131, %v446, 0
    %v473 = vsel %vm131, %v447, 0
    %v476 = vsel %vm150, %v455, 0
    %v479 = vsel %vm150, %v456, 0
    %481 = vmatpush.msra.mxu0 0.0
    %482 = vmatpush.msra.mxu0 0.0
    %483 = vmatpush.msra.mxu0 0.0
    %484 = vmatpush.msra.mxu0 0.0
    %485 = vmatpush.msra.mxu0 0.0
    %486 = vmatpush.msra.mxu0 0.0
    %487 = vmatpush.msra.mxu0 0.0
    %488 = vmatpush.msra.mxu0 0.0
    %489 = vmatpush.msra.mxu0 0.0
    %490 = vmatpush.msra.mxu0 0.0
    %491 = vmatpush.msra.mxu0 0.0
    %492 = vmatpush.msra.mxu0 0.0
    %493 = vmatpush.msra.mxu0 %v476
    %494 = vmatpush.msra.mxu0 %v453
    %495 = vmatpush.msra.mxu0 %v451
    %496 = vmatpush.msra.mxu0 %v449
    %497 = vmatmul.f32.gmra.mxu0 %v458
    %v498 = vpop.f32.mrf.mxu0
    %v499 = vadd.f32 0.0, %v498
    %500 = vmatmul.f32.gmra.mxu0 %v461
    %v501 = vpop.f32.mrf.mxu0
    %v502 = vadd.f32 0.0, %v501
    %503 = vmatmul.f32.gmra.mxu0 %v464
    %v504 = vpop.f32.mrf.mxu0
    %v505 = vadd.f32 0.0, %v504
    %506 = vmatmul.f32.gmra.mxu0 %v467
    %v507 = vpop.f32.mrf.mxu0
    %v508 = vadd.f32 0.0, %v507
    %509 = vmatmul.f32.gmra.mxu0 %v470
    %v510 = vpop.f32.mrf.mxu0
    %v511 = vadd.f32 0.0, %v510
    %512 = vmatmul.f32.gmra.mxu0 %v473
    %v513 = vpop.f32.mrf.mxu0
    %v514 = vadd.f32 0.0, %v513
    %515 = vdwg.mxu0
    %516 = vmatpush.msra.mxu0 0.0
    %517 = vmatpush.msra.mxu0 0.0
    %518 = vmatpush.msra.mxu0 0.0
    %519 = vmatpush.msra.mxu0 0.0
    %520 = vmatpush.msra.mxu0 0.0
    %521 = vmatpush.msra.mxu0 0.0
    %522 = vmatpush.msra.mxu0 0.0
    %523 = vmatpush.msra.mxu0 0.0
    %524 = vmatpush.msra.mxu0 0.0
    %525 = vmatpush.msra.mxu0 0.0
    %526 = vmatpush.msra.mxu0 0.0
    %527 = vmatpush.msra.mxu0 0.0
    %528 = vmatpush.msra.mxu0 %v479
    %529 = vmatpush.msra.mxu0 %v454
    %530 = vmatpush.msra.mxu0 %v452
    %531 = vmatpush.msra.mxu0 %v450
    %532 = vmatmul.f32.gmra.mxu0 %v458
    %v533 = vpop.f32.mrf.mxu0
    %v534 = vadd.f32 0.0, %v533
    %535 = vmatmul.f32.gmra.mxu0 %v461
    %v536 = vpop.f32.mrf.mxu0
    %v537 = vadd.f32 0.0, %v536
    %538 = vmatmul.f32.gmra.mxu0 %v464
    %v539 = vpop.f32.mrf.mxu0
    %v540 = vadd.f32 0.0, %v539
    %541 = vmatmul.f32.gmra.mxu0 %v467
    %v542 = vpop.f32.mrf.mxu0
    %v543 = vadd.f32 0.0, %v542
    %544 = vmatmul.f32.gmra.mxu0 %v470
    %v545 = vpop.f32.mrf.mxu0
    %v546 = vadd.f32 0.0, %v545
    %547 = vmatmul.f32.gmra.mxu0 %v473
    %v548 = vpop.f32.mrf.mxu0
    %v549 = vadd.f32 0.0, %v548
    %550 = vdwg.mxu0
    %v551 = vadd.f32 %v430, %v499
    %v552 = vadd.f32 %v431, %v534
    %v553 = vadd.f32 %v432, %v502
    %v554 = vadd.f32 %v433, %v537
    %v555 = vadd.f32 %v434, %v505
    %v556 = vadd.f32 %v435, %v540
    %v557 = vadd.f32 %v436, %v508
    %v558 = vadd.f32 %v437, %v543
    %v559 = vadd.f32 %v438, %v511
    %v560 = vadd.f32 %v439, %v546
    %v561 = vadd.f32 %v440, %v514
    %v562 = vadd.f32 %v441, %v549
    %v563 = vld [vmem:[%s0 + $0x4] sm:$0xff]
    %v564 = vld [vmem:[%s0 + $0xc] sm:$0xff]
    %v565 = vld [vmem:[%s0 + $0x14] sm:$0xff]
    %v566 = vld [vmem:[%s0 + $0x24] sm:$0xff]
    %v567 = vld [vmem:[%s0 + $0x2c] sm:$0xff]
    %v568 = vld [vmem:[%s0 + $0x34] sm:$0xff]
    %s569 = scalar_lea.vmem [#allocation5], 256
    %v570 = vld [vmem:[%s569] sm:$0xff]
    %v571 = vld [vmem:[%s569 + $0x8] sm:$0xff]
    %v572 = vld [vmem:[%s569 + $0x10] sm:$0xff]
    %v573 = vld [vmem:[%s569 + $0x18] sm:$0xff]
    %v574 = vld [vmem:[%s569 + $0x20] sm:$0xff]
    %v575 = vld [vmem:[%s569 + $0x28] sm:$0xff]
    %v576 = vld [vmem:[%s569 + $0x30] sm:$0xf]
    %v577 = vld [vmem:[%s569 + $0x38] sm:$0xf]
    %v579 = vsel %vm131, %v563, 0
    %v582 = vsel %vm131, %v564, 0
    %v585 = vsel %vm131, %v565, 0
    %v588 = vsel %vm131, %v566, 0
    %v591 = vsel %vm131, %v567, 0
    %v594 = vsel %vm131, %v568, 0
    %v597 = vsel %vm150, %v576, 0
    %v600 = vsel %vm150, %v577, 0
    %602 = vmatpush.msra.mxu0 0.0
    %603 = vmatpush.msra.mxu0 0.0
    %604 = vmatpush.msra.mxu0 0.0
    %605 = vmatpush.msra.mxu0 0.0
    %606 = vmatpush.msra.mxu0 0.0
    %607 = vmatpush.msra.mxu0 0.0
    %608 = vmatpush.msra.mxu0 0.0
    %609 = vmatpush.msra.mxu0 0.0
    %610 = vmatpush.msra.mxu0 0.0
    %611 = vmatpush.msra.mxu0 0.0
    %612 = vmatpush.msra.mxu0 0.0
    %613 = vmatpush.msra.mxu0 0.0
    %614 = vmatpush.msra.mxu0 %v597
    %615 = vmatpush.msra.mxu0 %v574
    %616 = vmatpush.msra.mxu0 %v572
    %617 = vmatpush.msra.mxu0 %v570
    %618 = vmatmul.f32.gmra.mxu0 %v579
    %v619 = vpop.f32.mrf.mxu0
    %v620 = vadd.f32 0.0, %v619
    %621 = vmatmul.f32.gmra.mxu0 %v582
    %v622 = vpop.f32.mrf.mxu0
    %v623 = vadd.f32 0.0, %v622
    %624 = vmatmul.f32.gmra.mxu0 %v585
    %v625 = vpop.f32.mrf.mxu0
    %v626 = vadd.f32 0.0, %v625
    %627 = vmatmul.f32.gmra.mxu0 %v588
    %v628 = vpop.f32.mrf.mxu0
    %v629 = vadd.f32 0.0, %v628
    %630 = vmatmul.f32.gmra.mxu0 %v591
    %v631 = vpop.f32.mrf.mxu0
    %v632 = vadd.f32 0.0, %v631
    %633 = vmatmul.f32.gmra.mxu0 %v594
    %v634 = vpop.f32.mrf.mxu0
    %v635 = vadd.f32 0.0, %v634
    %636 = vdwg.mxu0
    %637 = vmatpush.msra.mxu0 0.0
    %638 = vmatpush.msra.mxu0 0.0
    %639 = vmatpush.msra.mxu0 0.0
    %640 = vmatpush.msra.mxu0 0.0
    %641 = vmatpush.msra.mxu0 0.0
    %642 = vmatpush.msra.mxu0 0.0
    %643 = vmatpush.msra.mxu0 0.0
    %644 = vmatpush.msra.mxu0 0.0
    %645 = vmatpush.msra.mxu0 0.0
    %646 = vmatpush.msra.mxu0 0.0
    %647 = vmatpush.msra.mxu0 0.0
    %648 = vmatpush.msra.mxu0 0.0
    %649 = vmatpush.msra.mxu0 %v600
    %650 = vmatpush.msra.mxu0 %v575
    %651 = vmatpush.msra.mxu0 %v573
    %652 = vmatpush.msra.mxu0 %v571
    %653 = vmatmul.f32.gmra.mxu0 %v579
    %v654 = vpop.f32.mrf.mxu0
    %v655 = vadd.f32 0.0, %v654
    %656 = vmatmul.f32.gmra.mxu0 %v582
    %v657 = vpop.f32.mrf.mxu0
    %v658 = vadd.f32 0.0, %v657
    %659 = vmatmul.f32.gmra.mxu0 %v585
    %v660 = vpop.f32.mrf.mxu0
    %v661 = vadd.f32 0.0, %v660
    %662 = vmatmul.f32.gmra.mxu0 %v588
    %v663 = vpop.f32.mrf.mxu0
    %v664 = vadd.f32 0.0, %v663
    %665 = vmatmul.f32.gmra.mxu0 %v591
    %v666 = vpop.f32.mrf.mxu0
    %v667 = vadd.f32 0.0, %v666
    %668 = vmatmul.f32.gmra.mxu0 %v594
    %v669 = vpop.f32.mrf.mxu0
    %v670 = vadd.f32 0.0, %v669
    %671 = vdwg.mxu0
    %v672 = vadd.f32 %v551, %v620
    %v673 = vadd.f32 %v552, %v655
    %v674 = vadd.f32 %v553, %v623
    %v675 = vadd.f32 %v554, %v658
    %v676 = vadd.f32 %v555, %v626
    %v677 = vadd.f32 %v556, %v661
    %v678 = vadd.f32 %v557, %v629
    %v679 = vadd.f32 %v558, %v664
    %v680 = vadd.f32 %v559, %v632
    %v681 = vadd.f32 %v560, %v667
    %v682 = vadd.f32 %v561, %v635
    %v683 = vadd.f32 %v562, %v670
    %v684 = vmax.f32 %v672, %v673
    %v685 = vmax.f32 %v674, %v675
    %v686 = vmax.f32 %v676, %v677
    %v687 = vmax.f32 %v678, %v679
    %v688 = vmax.f32 %v680, %v681
    %v689 = vmax.f32 %v682, %v683
    %690 = vst [vmem:[#allocation2] sm:$0xff] %v684
    %691 = vst [vmem:[#allocation2 + $0x8] sm:$0xff] %v685
    %692 = vst [vmem:[#allocation2 + $0x10] sm:$0xff] %v686
    %693 = vst [vmem:[#allocation2 + $0x18] sm:$0xff] %v687
    %694 = vst [vmem:[#allocation2 + $0x20] sm:$0xff] %v688
    %695 = vst [vmem:[#allocation2 + $0x28] sm:$0xff] %v689
    %v696 = vld [vmem:[#allocation2] ss:$2 sm:$0xff]
    %s697 = scalar_lea.vmem [#allocation2], 16
    %v698 = vld [vmem:[%s697] ss:$2 sm:$0xf]
    %s699 = scalar_lea.vmem [#allocation2], 24
    %v700 = vld [vmem:[%s699] ss:$2 sm:$0xff]
    %s701 = scalar_lea.vmem [#allocation2], 40
    %v702 = vld [vmem:[%s701] ss:$2 sm:$0xf]
    %s703 = scalar_lea.vmem [#allocation2], 1
    %v704 = vld [vmem:[%s703] ss:$2 sm:$0xff]
    %s705 = scalar_lea.vmem [#allocation2], 17
    %v706 = vld [vmem:[%s705] ss:$2 sm:$0xf]
    %s707 = scalar_lea.vmem [#allocation2], 25
    %v708 = vld [vmem:[%s707] ss:$2 sm:$0xff]
    %s709 = scalar_lea.vmem [#allocation2], 41
    %v710 = vld [vmem:[%s709] ss:$2 sm:$0xf]
    %v711 = vmax.f32 %v696, %v704
    %v712 = vmax.f32 %v698, %v706
    %v713 = vmax.f32 %v700, %v708
    %v714 = vmax.f32 %v702, %v710
    %v715 = vld [vmem:[%s2] sm:$0x1]
    %v717 = vperm.slane %v715, 0
    %v719 = vadd.f32 %v711, %v717
    %v720 = vadd.f32 %v712, %v717
    %v721 = vadd.f32 %v713, %v717
    %v722 = vadd.f32 %v714, %v717
    %v723 = vmax.f32 %v719, 0.0
    %v724 = vmax.f32 %v720, 0.0
    %v725 = vmax.f32 %v721, 0.0
    %v726 = vmax.f32 %v722, 0.0
    %727 = vst [vmem:[#allocation3] sm:$0xff] %v723
    %728 = vst [vmem:[#allocation3 + $0x8] sm:$0xf] %v724
    %729 = vst [vmem:[#allocation3 + $0x10] sm:$0xff] %v725
    %730 = vst [vmem:[#allocation3 + $0x18] sm:$0xf] %v726
    %v731 = vld [vmem:[#allocation3] sm:$0xff]
    %v732 = vld [vmem:[#allocation3 + $0x10] sm:$0xff]
    %v733 = vld [vmem:[#allocation8] sm:$0xff]
    %v734 = vld [vmem:[#allocation8 + $0x8] sm:$0xff]
    %v735 = vld [vmem:[#allocation8 + $0x10] sm:$0xff]
    %v736 = vld [vmem:[#allocation8 + $0x18] sm:$0xff]
    %v737 = vld [vmem:[#allocation8 + $0x20] sm:$0xff]
    %v738 = vld [vmem:[#allocation8 + $0x28] sm:$0xff]
    %v739 = vld [vmem:[#allocation8 + $0x30] sm:$0xff]
    %v740 = vld [vmem:[#allocation8 + $0x38] sm:$0xff]
    %v741 = vld [vmem:[#allocation8 + $0x40] sm:$0xff]
    %v742 = vld [vmem:[#allocation8 + $0x48] sm:$0xff]
    %v743 = vld [vmem:[#allocation8 + $0x50] sm:$0xff]
    %v744 = vld [vmem:[#allocation8 + $0x58] sm:$0xff]
    %v745 = vld [vmem:[#allocation8 + $0x60] sm:$0xff]
    %v746 = vld [vmem:[#allocation8 + $0x68] sm:$0xff]
    %v747 = vld [vmem:[#allocation8 + $0x70] sm:$0xff]
    %v748 = vld [vmem:[#allocation8 + $0x78] sm:$0xff]
    %v749 = vld [vmem:[#allocation8 + $0x80] sm:$0xff]
    %v750 = vld [vmem:[#allocation8 + $0x88] sm:$0xff]
    %v751 = vld [vmem:[#allocation8 + $0x90] sm:$0xff]
    %v752 = vld [vmem:[#allocation8 + $0x98] sm:$0xff]
    %v753 = vld [vmem:[#allocation8 + $0xa0] sm:$0xff]
    %v754 = vld [vmem:[#allocation8 + $0xa8] sm:$0xff]
    %v755 = vld [vmem:[#allocation8 + $0xb0] sm:$0xff]
    %v756 = vld [vmem:[#allocation8 + $0xb8] sm:$0xff]
    %v757 = vld [vmem:[#allocation8 + $0xc0] sm:$0xff]
    %v758 = vld [vmem:[#allocation8 + $0xc8] sm:$0xff]
    %v759 = vld [vmem:[#allocation8 + $0xd0] sm:$0xff]
    %v760 = vld [vmem:[#allocation8 + $0xd8] sm:$0xff]
    %v761 = vld [vmem:[#allocation8 + $0xe0] sm:$0xff]
    %v762 = vld [vmem:[#allocation8 + $0xe8] sm:$0xff]
    %v763 = vld [vmem:[#allocation8 + $0xf0] sm:$0xff]
    %v764 = vld [vmem:[#allocation8 + $0xf8] sm:$0xff]
    %v765 = vld [vmem:[#allocation3 + $0x1] sm:$0xff]
    %v766 = vld [vmem:[#allocation3 + $0x11] sm:$0xff]
    %s767 = scalar_lea.vmem [#allocation8], 256
    %v768 = vld [vmem:[%s767] sm:$0xff]
    %v769 = vld [vmem:[%s767 + $0x8] sm:$0xff]
    %v770 = vld [vmem:[%s767 + $0x10] sm:$0xff]
    %v771 = vld [vmem:[%s767 + $0x18] sm:$0xff]
    %v772 = vld [vmem:[%s767 + $0x20] sm:$0xff]
    %v773 = vld [vmem:[%s767 + $0x28] sm:$0xff]
    %v774 = vld [vmem:[%s767 + $0x30] sm:$0xff]
    %v775 = vld [vmem:[%s767 + $0x38] sm:$0xff]
    %v776 = vld [vmem:[%s767 + $0x40] sm:$0xff]
    %v777 = vld [vmem:[%s767 + $0x48] sm:$0xff]
    %v778 = vld [vmem:[%s767 + $0x50] sm:$0xff]
    %v779 = vld [vmem:[%s767 + $0x58] sm:$0xff]
    %v780 = vld [vmem:[%s767 + $0x60] sm:$0xff]
    %v781 = vld [vmem:[%s767 + $0x68] sm:$0xff]
    %v782 = vld [vmem:[%s767 + $0x70] sm:$0xff]
    %v783 = vld [vmem:[%s767 + $0x78] sm:$0xff]
    %v784 = vld [vmem:[%s767 + $0x80] sm:$0xff]
    %v785 = vld [vmem:[%s767 + $0x88] sm:$0xff]
    %v786 = vld [vmem:[%s767 + $0x90] sm:$0xff]
    %v787 = vld [vmem:[%s767 + $0x98] sm:$0xff]
    %v788 = vld [vmem:[%s767 + $0xa0] sm:$0xff]
    %v789 = vld [vmem:[%s767 + $0xa8] sm:$0xff]
    %v790 = vld [vmem:[%s767 + $0xb0] sm:$0xff]
    %v791 = vld [vmem:[%s767 + $0xb8] sm:$0xff]
    %v792 = vld [vmem:[%s767 + $0xc0] sm:$0xff]
    %v793 = vld [vmem:[%s767 + $0xc8] sm:$0xff]
    %v794 = vld [vmem:[%s767 + $0xd0] sm:$0xff]
    %v795 = vld [vmem:[%s767 + $0xd8] sm:$0xff]
    %v796 = vld [vmem:[%s767 + $0xe0] sm:$0xff]
    %v797 = vld [vmem:[%s767 + $0xe8] sm:$0xff]
    %v798 = vld [vmem:[%s767 + $0xf0] sm:$0xff]
    %v799 = vld [vmem:[%s767 + $0xf8] sm:$0xff]
    %800 = vmatpush.msra.mxu0 %v798
    %801 = vmatpush.msra.mxu0 %v796
    %802 = vmatpush.msra.mxu0 %v794
    %803 = vmatpush.msra.mxu0 %v792
    %804 = vmatpush.msra.mxu0 %v790
    %805 = vmatpush.msra.mxu0 %v788
    %806 = vmatpush.msra.mxu0 %v786
    %807 = vmatpush.msra.mxu0 %v784
    %808 = vmatpush.msra.mxu0 %v782
    %809 = vmatpush.msra.mxu0 %v780
    %810 = vmatpush.msra.mxu0 %v778
    %811 = vmatpush.msra.mxu0 %v776
    %812 = vmatpush.msra.mxu0 %v774
    %813 = vmatpush.msra.mxu0 %v772
    %814 = vmatpush.msra.mxu0 %v770
    %815 = vmatpush.msra.mxu0 %v768
    %816 = vmatmul.f32.gmra.mxu0 %v765
    %v817 = vpop.f32.mrf.mxu0
    %v818 = vadd.f32 0.0, %v817
    %819 = vmatmul.f32.gmra.mxu0 %v766
    %v820 = vpop.f32.mrf.mxu0
    %v821 = vadd.f32 0.0, %v820
    %822 = vdwg.mxu0
    %823 = vmatpush.msra.mxu0 %v799
    %824 = vmatpush.msra.mxu0 %v797
    %825 = vmatpush.msra.mxu0 %v795
    %826 = vmatpush.msra.mxu0 %v793
    %827 = vmatpush.msra.mxu0 %v791
    %828 = vmatpush.msra.mxu0 %v789
    %829 = vmatpush.msra.mxu0 %v787
    %830 = vmatpush.msra.mxu0 %v785
    %831 = vmatpush.msra.mxu0 %v783
    %832 = vmatpush.msra.mxu0 %v781
    %833 = vmatpush.msra.mxu0 %v779
    %834 = vmatpush.msra.mxu0 %v777
    %835 = vmatpush.msra.mxu0 %v775
    %836 = vmatpush.msra.mxu0 %v773
    %837 = vmatpush.msra.mxu0 %v771
    %838 = vmatpush.msra.mxu0 %v769
    %839 = vmatmul.f32.gmra.mxu0 %v765
    %v840 = vpop.f32.mrf.mxu0
    %v841 = vadd.f32 0.0, %v840
    %842 = vmatmul.f32.gmra.mxu0 %v766
    %v843 = vpop.f32.mrf.mxu0
    %v844 = vadd.f32 0.0, %v843
    %845 = vdwg.mxu0
    %846 = vmatpush.msra.mxu0 %v763
    %847 = vmatpush.msra.mxu0 %v761
    %848 = vmatpush.msra.mxu0 %v759
    %849 = vmatpush.msra.mxu0 %v757
    %850 = vmatpush.msra.mxu0 %v755
    %851 = vmatpush.msra.mxu0 %v753
    %852 = vmatpush.msra.mxu0 %v751
    %853 = vmatpush.msra.mxu0 %v749
    %854 = vmatpush.msra.mxu0 %v747
    %855 = vmatpush.msra.mxu0 %v745
    %856 = vmatpush.msra.mxu0 %v743
    %857 = vmatpush.msra.mxu0 %v741
    %858 = vmatpush.msra.mxu0 %v739
    %859 = vmatpush.msra.mxu0 %v737
    %860 = vmatpush.msra.mxu0 %v735
    %861 = vmatpush.msra.mxu0 %v733
    %862 = vmatmul.f32.gmra.mxu0 %v731
    %v863 = vpop.f32.mrf.mxu0
    %v864 = vadd.f32 %v818, %v863
    %865 = vmatmul.f32.gmra.mxu0 %v732
    %v866 = vpop.f32.mrf.mxu0
    %v867 = vadd.f32 %v821, %v866
    %868 = vdwg.mxu0
    %869 = vmatpush.msra.mxu0 %v764
    %870 = vmatpush.msra.mxu0 %v762
    %871 = vmatpush.msra.mxu0 %v760
    %872 = vmatpush.msra.mxu0 %v758
    %873 = vmatpush.msra.mxu0 %v756
    %874 = vmatpush.msra.mxu0 %v754
    %875 = vmatpush.msra.mxu0 %v752
    %876 = vmatpush.msra.mxu0 %v750
    %877 = vmatpush.msra.mxu0 %v748
    %878 = vmatpush.msra.mxu0 %v746
    %879 = vmatpush.msra.mxu0 %v744
    %880 = vmatpush.msra.mxu0 %v742
    %881 = vmatpush.msra.mxu0 %v740
    %882 = vmatpush.msra.mxu0 %v738
    %883 = vmatpush.msra.mxu0 %v736
    %884 = vmatpush.msra.mxu0 %v734
    %885 = vmatmul.f32.gmra.mxu0 %v731
    %v886 = vpop.f32.mrf.mxu0
    %v887 = vadd.f32 %v841, %v886
    %888 = vmatmul.f32.gmra.mxu0 %v732
    %v889 = vpop.f32.mrf.mxu0
    %v890 = vadd.f32 %v844, %v889
    %891 = vdwg.mxu0
    %v892 = vld [vmem:[#allocation3 + $0x2] sm:$0xff]
    %v893 = vld [vmem:[#allocation3 + $0x12] sm:$0xff]
    %s894 = scalar_lea.vmem [#allocation8], 512
    %v895 = vld [vmem:[%s894] sm:$0xff]
    %v896 = vld [vmem:[%s894 + $0x8] sm:$0xff]
    %v897 = vld [vmem:[%s894 + $0x10] sm:$0xff]
    %v898 = vld [vmem:[%s894 + $0x18] sm:$0xff]
    %v899 = vld [vmem:[%s894 + $0x20] sm:$0xff]
    %v900 = vld [vmem:[%s894 + $0x28] sm:$0xff]
    %v901 = vld [vmem:[%s894 + $0x30] sm:$0xff]
    %v902 = vld [vmem:[%s894 + $0x38] sm:$0xff]
    %v903 = vld [vmem:[%s894 + $0x40] sm:$0xff]
    %v904 = vld [vmem:[%s894 + $0x48] sm:$0xff]
    %v905 = vld [vmem:[%s894 + $0x50] sm:$0xff]
    %v906 = vld [vmem:[%s894 + $0x58] sm:$0xff]
    %v907 = vld [vmem:[%s894 + $0x60] sm:$0xff]
    %v908 = vld [vmem:[%s894 + $0x68] sm:$0xff]
    %v909 = vld [vmem:[%s894 + $0x70] sm:$0xff]
    %v910 = vld [vmem:[%s894 + $0x78] sm:$0xff]
    %v911 = vld [vmem:[%s894 + $0x80] sm:$0xff]
    %v912 = vld [vmem:[%s894 + $0x88] sm:$0xff]
    %v913 = vld [vmem:[%s894 + $0x90] sm:$0xff]
    %v914 = vld [vmem:[%s894 + $0x98] sm:$0xff]
    %v915 = vld [vmem:[%s894 + $0xa0] sm:$0xff]
    %v916 = vld [vmem:[%s894 + $0xa8] sm:$0xff]
    %v917 = vld [vmem:[%s894 + $0xb0] sm:$0xff]
    %v918 = vld [vmem:[%s894 + $0xb8] sm:$0xff]
    %v919 = vld [vmem:[%s894 + $0xc0] sm:$0xff]
    %v920 = vld [vmem:[%s894 + $0xc8] sm:$0xff]
    %v921 = vld [vmem:[%s894 + $0xd0] sm:$0xff]
    %v922 = vld [vmem:[%s894 + $0xd8] sm:$0xff]
    %v923 = vld [vmem:[%s894 + $0xe0] sm:$0xff]
    %v924 = vld [vmem:[%s894 + $0xe8] sm:$0xff]
    %v925 = vld [vmem:[%s894 + $0xf0] sm:$0xff]
    %v926 = vld [vmem:[%s894 + $0xf8] sm:$0xff]
    %927 = vmatpush.msra.mxu0 %v925
    %928 = vmatpush.msra.mxu0 %v923
    %929 = vmatpush.msra.mxu0 %v921
    %930 = vmatpush.msra.mxu0 %v919
    %931 = vmatpush.msra.mxu0 %v917
    %932 = vmatpush.msra.mxu0 %v915
    %933 = vmatpush.msra.mxu0 %v913
    %934 = vmatpush.msra.mxu0 %v911
    %935 = vmatpush.msra.mxu0 %v909
    %936 = vmatpush.msra.mxu0 %v907
    %937 = vmatpush.msra.mxu0 %v905
    %938 = vmatpush.msra.mxu0 %v903
    %939 = vmatpush.msra.mxu0 %v901
    %940 = vmatpush.msra.mxu0 %v899
    %941 = vmatpush.msra.mxu0 %v897
    %942 = vmatpush.msra.mxu0 %v895
    %943 = vmatmul.f32.gmra.mxu0 %v892
    %v944 = vpop.f32.mrf.mxu0
    %v945 = vadd.f32 0.0, %v944
    %946 = vmatmul.f32.gmra.mxu0 %v893
    %v947 = vpop.f32.mrf.mxu0
    %v948 = vadd.f32 0.0, %v947
    %949 = vdwg.mxu0
    %950 = vmatpush.msra.mxu0 %v926
    %951 = vmatpush.msra.mxu0 %v924
    %952 = vmatpush.msra.mxu0 %v922
    %953 = vmatpush.msra.mxu0 %v920
    %954 = vmatpush.msra.mxu0 %v918
    %955 = vmatpush.msra.mxu0 %v916
    %956 = vmatpush.msra.mxu0 %v914
    %957 = vmatpush.msra.mxu0 %v912
    %958 = vmatpush.msra.mxu0 %v910
    %959 = vmatpush.msra.mxu0 %v908
    %960 = vmatpush.msra.mxu0 %v906
    %961 = vmatpush.msra.mxu0 %v904
    %962 = vmatpush.msra.mxu0 %v902
    %963 = vmatpush.msra.mxu0 %v900
    %964 = vmatpush.msra.mxu0 %v898
    %965 = vmatpush.msra.mxu0 %v896
    %966 = vmatmul.f32.gmra.mxu0 %v892
    %v967 = vpop.f32.mrf.mxu0
    %v968 = vadd.f32 0.0, %v967
    %969 = vmatmul.f32.gmra.mxu0 %v893
    %v970 = vpop.f32.mrf.mxu0
    %v971 = vadd.f32 0.0, %v970
    %972 = vdwg.mxu0
    %v973 = vadd.f32 %v864, %v945
    %v974 = vadd.f32 %v887, %v968
    %v975 = vadd.f32 %v867, %v948
    %v976 = vadd.f32 %v890, %v971
    %v977 = vld [vmem:[#allocation3 + $0x3] sm:$0xff]
    %v978 = vld [vmem:[#allocation3 + $0x13] sm:$0xff]
    %s979 = scalar_lea.vmem [#allocation8], 768
    %v980 = vld [vmem:[%s979] sm:$0xff]
    %v981 = vld [vmem:[%s979 + $0x8] sm:$0xff]
    %v982 = vld [vmem:[%s979 + $0x10] sm:$0xff]
    %v983 = vld [vmem:[%s979 + $0x18] sm:$0xff]
    %v984 = vld [vmem:[%s979 + $0x20] sm:$0xff]
    %v985 = vld [vmem:[%s979 + $0x28] sm:$0xff]
    %v986 = vld [vmem:[%s979 + $0x30] sm:$0xff]
    %v987 = vld [vmem:[%s979 + $0x38] sm:$0xff]
    %v988 = vld [vmem:[%s979 + $0x40] sm:$0xff]
    %v989 = vld [vmem:[%s979 + $0x48] sm:$0xff]
    %v990 = vld [vmem:[%s979 + $0x50] sm:$0xff]
    %v991 = vld [vmem:[%s979 + $0x58] sm:$0xff]
    %v992 = vld [vmem:[%s979 + $0x60] sm:$0xff]
    %v993 = vld [vmem:[%s979 + $0x68] sm:$0xff]
    %v994 = vld [vmem:[%s979 + $0x70] sm:$0xff]
    %v995 = vld [vmem:[%s979 + $0x78] sm:$0xff]
    %v996 = vld [vmem:[%s979 + $0x80] sm:$0xff]
    %v997 = vld [vmem:[%s979 + $0x88] sm:$0xff]
    %v998 = vld [vmem:[%s979 + $0x90] sm:$0xff]
    %v999 = vld [vmem:[%s979 + $0x98] sm:$0xff]
    %v1000 = vld [vmem:[%s979 + $0xa0] sm:$0xff]
    %v1001 = vld [vmem:[%s979 + $0xa8] sm:$0xff]
    %v1002 = vld [vmem:[%s979 + $0xb0] sm:$0xff]
    %v1003 = vld [vmem:[%s979 + $0xb8] sm:$0xff]
    %v1004 = vld [vmem:[%s979 + $0xc0] sm:$0xff]
    %v1005 = vld [vmem:[%s979 + $0xc8] sm:$0xff]
    %v1006 = vld [vmem:[%s979 + $0xd0] sm:$0xff]
    %v1007 = vld [vmem:[%s979 + $0xd8] sm:$0xff]
    %v1008 = vld [vmem:[%s979 + $0xe0] sm:$0xff]
    %v1009 = vld [vmem:[%s979 + $0xe8] sm:$0xff]
    %v1010 = vld [vmem:[%s979 + $0xf0] sm:$0xff]
    %v1011 = vld [vmem:[%s979 + $0xf8] sm:$0xff]
    %1012 = vmatpush.msra.mxu0 %v1010
    %1013 = vmatpush.msra.mxu0 %v1008
    %1014 = vmatpush.msra.mxu0 %v1006
    %1015 = vmatpush.msra.mxu0 %v1004
    %1016 = vmatpush.msra.mxu0 %v1002
    %1017 = vmatpush.msra.mxu0 %v1000
    %1018 = vmatpush.msra.mxu0 %v998
    %1019 = vmatpush.msra.mxu0 %v996
    %1020 = vmatpush.msra.mxu0 %v994
    %1021 = vmatpush.msra.mxu0 %v992
    %1022 = vmatpush.msra.mxu0 %v990
    %1023 = vmatpush.msra.mxu0 %v988
    %1024 = vmatpush.msra.mxu0 %v986
    %1025 = vmatpush.msra.mxu0 %v984
    %1026 = vmatpush.msra.mxu0 %v982
    %1027 = vmatpush.msra.mxu0 %v980
    %1028 = vmatmul.f32.gmra.mxu0 %v977
    %v1029 = vpop.f32.mrf.mxu0
    %v1030 = vadd.f32 0.0, %v1029
    %1031 = vmatmul.f32.gmra.mxu0 %v978
    %v1032 = vpop.f32.mrf.mxu0
    %v1033 = vadd.f32 0.0, %v1032
    %1034 = vdwg.mxu0
    %1035 = vmatpush.msra.mxu0 %v1011
    %1036 = vmatpush.msra.mxu0 %v1009
    %1037 = vmatpush.msra.mxu0 %v1007
    %1038 = vmatpush.msra.mxu0 %v1005
    %1039 = vmatpush.msra.mxu0 %v1003
    %1040 = vmatpush.msra.mxu0 %v1001
    %1041 = vmatpush.msra.mxu0 %v999
    %1042 = vmatpush.msra.mxu0 %v997
    %1043 = vmatpush.msra.mxu0 %v995
    %1044 = vmatpush.msra.mxu0 %v993
    %1045 = vmatpush.msra.mxu0 %v991
    %1046 = vmatpush.msra.mxu0 %v989
    %1047 = vmatpush.msra.mxu0 %v987
    %1048 = vmatpush.msra.mxu0 %v985
    %1049 = vmatpush.msra.mxu0 %v983
    %1050 = vmatpush.msra.mxu0 %v981
    %1051 = vmatmul.f32.gmra.mxu0 %v977
    %v1052 = vpop.f32.mrf.mxu0
    %v1053 = vadd.f32 0.0, %v1052
    %1054 = vmatmul.f32.gmra.mxu0 %v978
    %v1055 = vpop.f32.mrf.mxu0
    %v1056 = vadd.f32 0.0, %v1055
    %1057 = vdwg.mxu0
    %v1058 = vadd.f32 %v973, %v1030
    %v1059 = vadd.f32 %v974, %v1053
    %v1060 = vadd.f32 %v975, %v1033
    %v1061 = vadd.f32 %v976, %v1056
    %v1062 = vld [vmem:[#allocation3 + $0x4] sm:$0xff]
    %v1063 = vld [vmem:[#allocation3 + $0x14] sm:$0xff]
    %s1064 = scalar_lea.vmem [#allocation8], 1024
    %v1065 = vld [vmem:[%s1064] sm:$0xff]
    %v1066 = vld [vmem:[%s1064 + $0x8] sm:$0xff]
    %v1067 = vld [vmem:[%s1064 + $0x10] sm:$0xff]
    %v1068 = vld [vmem:[%s1064 + $0x18] sm:$0xff]
    %v1069 = vld [vmem:[%s1064 + $0x20] sm:$0xff]
    %v1070 = vld [vmem:[%s1064 + $0x28] sm:$0xff]
    %v1071 = vld [vmem:[%s1064 + $0x30] sm:$0xff]
    %v1072 = vld [vmem:[%s1064 + $0x38] sm:$0xff]
    %v1073 = vld [vmem:[%s1064 + $0x40] sm:$0xff]
    %v1074 = vld [vmem:[%s1064 + $0x48] sm:$0xff]
    %v1075 = vld [vmem:[%s1064 + $0x50] sm:$0xff]
    %v1076 = vld [vmem:[%s1064 + $0x58] sm:$0xff]
    %v1077 = vld [vmem:[%s1064 + $0x60] sm:$0xff]
    %v1078 = vld [vmem:[%s1064 + $0x68] sm:$0xff]
    %v1079 = vld [vmem:[%s1064 + $0x70] sm:$0xff]
    %v1080 = vld [vmem:[%s1064 + $0x78] sm:$0xff]
    %v1081 = vld [vmem:[%s1064 + $0x80] sm:$0xff]
    %v1082 = vld [vmem:[%s1064 + $0x88] sm:$0xff]
    %v1083 = vld [vmem:[%s1064 + $0x90] sm:$0xff]
    %v1084 = vld [vmem:[%s1064 + $0x98] sm:$0xff]
    %v1085 = vld [vmem:[%s1064 + $0xa0] sm:$0xff]
    %v1086 = vld [vmem:[%s1064 + $0xa8] sm:$0xff]
    %v1087 = vld [vmem:[%s1064 + $0xb0] sm:$0xff]
    %v1088 = vld [vmem:[%s1064 + $0xb8] sm:$0xff]
    %v1089 = vld [vmem:[%s1064 + $0xc0] sm:$0xff]
    %v1090 = vld [vmem:[%s1064 + $0xc8] sm:$0xff]
    %v1091 = vld [vmem:[%s1064 + $0xd0] sm:$0xff]
    %v1092 = vld [vmem:[%s1064 + $0xd8] sm:$0xff]
    %v1093 = vld [vmem:[%s1064 + $0xe0] sm:$0xff]
    %v1094 = vld [vmem:[%s1064 + $0xe8] sm:$0xff]
    %v1095 = vld [vmem:[%s1064 + $0xf0] sm:$0xff]
    %v1096 = vld [vmem:[%s1064 + $0xf8] sm:$0xff]
    %1097 = vmatpush.msra.mxu0 %v1095
    %1098 = vmatpush.msra.mxu0 %v1093
    %1099 = vmatpush.msra.mxu0 %v1091
    %1100 = vmatpush.msra.mxu0 %v1089
    %1101 = vmatpush.msra.mxu0 %v1087
    %1102 = vmatpush.msra.mxu0 %v1085
    %1103 = vmatpush.msra.mxu0 %v1083
    %1104 = vmatpush.msra.mxu0 %v1081
    %1105 = vmatpush.msra.mxu0 %v1079
    %1106 = vmatpush.msra.mxu0 %v1077
    %1107 = vmatpush.msra.mxu0 %v1075
    %1108 = vmatpush.msra.mxu0 %v1073
    %1109 = vmatpush.msra.mxu0 %v1071
    %1110 = vmatpush.msra.mxu0 %v1069
    %1111 = vmatpush.msra.mxu0 %v1067
    %1112 = vmatpush.msra.mxu0 %v1065
    %1113 = vmatmul.f32.gmra.mxu0 %v1062
    %v1114 = vpop.f32.mrf.mxu0
    %v1115 = vadd.f32 0.0, %v1114
    %1116 = vmatmul.f32.gmra.mxu0 %v1063
    %v1117 = vpop.f32.mrf.mxu0
    %v1118 = vadd.f32 0.0, %v1117
    %1119 = vdwg.mxu0
    %1120 = vmatpush.msra.mxu0 %v1096
    %1121 = vmatpush.msra.mxu0 %v1094
    %1122 = vmatpush.msra.mxu0 %v1092
    %1123 = vmatpush.msra.mxu0 %v1090
    %1124 = vmatpush.msra.mxu0 %v1088
    %1125 = vmatpush.msra.mxu0 %v1086
    %1126 = vmatpush.msra.mxu0 %v1084
    %1127 = vmatpush.msra.mxu0 %v1082
    %1128 = vmatpush.msra.mxu0 %v1080
    %1129 = vmatpush.msra.mxu0 %v1078
    %1130 = vmatpush.msra.mxu0 %v1076
    %1131 = vmatpush.msra.mxu0 %v1074
    %1132 = vmatpush.msra.mxu0 %v1072
    %1133 = vmatpush.msra.mxu0 %v1070
    %1134 = vmatpush.msra.mxu0 %v1068
    %1135 = vmatpush.msra.mxu0 %v1066
    %1136 = vmatmul.f32.gmra.mxu0 %v1062
    %v1137 = vpop.f32.mrf.mxu0
    %v1138 = vadd.f32 0.0, %v1137
    %1139 = vmatmul.f32.gmra.mxu0 %v1063
    %v1140 = vpop.f32.mrf.mxu0
    %v1141 = vadd.f32 0.0, %v1140
    %1142 = vdwg.mxu0
    %v1143 = vadd.f32 %v1058, %v1115
    %v1144 = vadd.f32 %v1059, %v1138
    %v1145 = vadd.f32 %v1060, %v1118
    %v1146 = vadd.f32 %v1061, %v1141
    %v1147 = vmax.f32 %v1143, %v1144
    %v1148 = vmax.f32 %v1145, %v1146
    %1149 = vst [vmem:[#allocation4] sm:$0xff] %v1147
    %1150 = vst [vmem:[#allocation4 + $0x8] sm:$0xff] %v1148
    %v1151 = vld [vmem:[#allocation4] ss:$8 sm:$0x3]
    %s1152 = scalar_lea.vmem [#allocation4], 1
    %v1153 = vld [vmem:[%s1152] ss:$8 sm:$0x3]
    %v1154 = vmax.f32 %v1151, %v1153
    %v1155 = vld [vmem:[%s4] sm:$0x1]
    %v1157 = vperm.slane %v1155, 0
    %v1159 = vadd.f32 %v1154, %v1157
    %v1160 = vmax.f32 %v1159, 0.0
    %v1161 = vld [vmem:[#allocation10] sm:$0xff]
    %v1162 = vld [vmem:[#allocation10 + $0x8] sm:$0xff]
    %v1163 = vld [vmem:[#allocation10 + $0x10] sm:$0xff]
    %v1164 = vld [vmem:[#allocation10 + $0x18] sm:$0xff]
    %v1165 = vld [vmem:[#allocation10 + $0x20] sm:$0xff]
    %v1166 = vld [vmem:[#allocation10 + $0x28] sm:$0xff]
    %v1167 = vld [vmem:[#allocation10 + $0x30] sm:$0xff]
    %v1168 = vld [vmem:[#allocation10 + $0x38] sm:$0xff]
    %v1169 = vld [vmem:[#allocation10 + $0x40] sm:$0xff]
    %v1170 = vld [vmem:[#allocation10 + $0x48] sm:$0xff]
    %v1171 = vld [vmem:[#allocation10 + $0x50] sm:$0xff]
    %v1172 = vld [vmem:[#allocation10 + $0x58] sm:$0xff]
    %v1173 = vld [vmem:[#allocation10 + $0x60] sm:$0xff]
    %v1174 = vld [vmem:[#allocation10 + $0x68] sm:$0xff]
    %v1175 = vld [vmem:[#allocation10 + $0x70] sm:$0xff]
    %v1176 = vld [vmem:[#allocation10 + $0x78] sm:$0xff]
    %s1177 = scalar_lea.vmem [#allocation4], 2
    %v1178 = vld [vmem:[%s1177] ss:$8 sm:$0x3]
    %s1179 = scalar_lea.vmem [#allocation4], 3
    %v1180 = vld [vmem:[%s1179] ss:$8 sm:$0x3]
    %v1181 = vmax.f32 %v1178, %v1180
    %v1182 = vadd.f32 %v1181, %v1157
    %v1183 = vmax.f32 %v1182, 0.0
    %s1184 = scalar_lea.vmem [#allocation10], 128
    %v1185 = vld [vmem:[%s1184] sm:$0xff]
    %v1186 = vld [vmem:[%s1184 + $0x8] sm:$0xff]
    %v1187 = vld [vmem:[%s1184 + $0x10] sm:$0xff]
    %v1188 = vld [vmem:[%s1184 + $0x18] sm:$0xff]
    %v1189 = vld [vmem:[%s1184 + $0x20] sm:$0xff]
    %v1190 = vld [vmem:[%s1184 + $0x28] sm:$0xff]
    %v1191 = vld [vmem:[%s1184 + $0x30] sm:$0xff]
    %v1192 = vld [vmem:[%s1184 + $0x38] sm:$0xff]
    %v1193 = vld [vmem:[%s1184 + $0x40] sm:$0xff]
    %v1194 = vld [vmem:[%s1184 + $0x48] sm:$0xff]
    %v1195 = vld [vmem:[%s1184 + $0x50] sm:$0xff]
    %v1196 = vld [vmem:[%s1184 + $0x58] sm:$0xff]
    %v1197 = vld [vmem:[%s1184 + $0x60] sm:$0xff]
    %v1198 = vld [vmem:[%s1184 + $0x68] sm:$0xff]
    %v1199 = vld [vmem:[%s1184 + $0x70] sm:$0xff]
    %v1200 = vld [vmem:[%s1184 + $0x78] sm:$0xff]
    %1201 = vmatpush.msra.mxu0 %v1200
    %1202 = vmatpush.msra.mxu0 %v1199
    %1203 = vmatpush.msra.mxu0 %v1198
    %1204 = vmatpush.msra.mxu0 %v1197
    %1205 = vmatpush.msra.mxu0 %v1196
    %1206 = vmatpush.msra.mxu0 %v1195
    %1207 = vmatpush.msra.mxu0 %v1194
    %1208 = vmatpush.msra.mxu0 %v1193
    %1209 = vmatpush.msra.mxu0 %v1192
    %1210 = vmatpush.msra.mxu0 %v1191
    %1211 = vmatpush.msra.mxu0 %v1190
    %1212 = vmatpush.msra.mxu0 %v1189
    %1213 = vmatpush.msra.mxu0 %v1188
    %1214 = vmatpush.msra.mxu0 %v1187
    %1215 = vmatpush.msra.mxu0 %v1186
    %1216 = vmatpush.msra.mxu0 %v1185
    %1217 = vmatmul.f32.gmra.mxu0 %v1183
    %v1218 = vpop.f32.mrf.mxu0
    %v1219 = vadd.f32 0.0, %v1218
    %1220 = vdwg.mxu0
    %1221 = vmatpush.msra.mxu0 %v1176
    %1222 = vmatpush.msra.mxu0 %v1175
    %1223 = vmatpush.msra.mxu0 %v1174
    %1224 = vmatpush.msra.mxu0 %v1173
    %1225 = vmatpush.msra.mxu0 %v1172
    %1226 = vmatpush.msra.mxu0 %v1171
    %1227 = vmatpush.msra.mxu0 %v1170
    %1228 = vmatpush.msra.mxu0 %v1169
    %1229 = vmatpush.msra.mxu0 %v1168
    %1230 = vmatpush.msra.mxu0 %v1167
    %1231 = vmatpush.msra.mxu0 %v1166
    %1232 = vmatpush.msra.mxu0 %v1165
    %1233 = vmatpush.msra.mxu0 %v1164
    %1234 = vmatpush.msra.mxu0 %v1163
    %1235 = vmatpush.msra.mxu0 %v1162
    %1236 = vmatpush.msra.mxu0 %v1161
    %1237 = vmatmul.f32.gmra.mxu0 %v1160
    %v1238 = vpop.f32.mrf.mxu0
    %v1239 = vadd.f32 %v1219, %v1238
    %1240 = vdwg.mxu0
    %s1241 = scalar_lea.vmem [#allocation4], 4
    %v1242 = vld [vmem:[%s1241] ss:$8 sm:$0x3]
    %s1243 = scalar_lea.vmem [#allocation4], 5
    %v1244 = vld [vmem:[%s1243] ss:$8 sm:$0x3]
    %v1245 = vmax.f32 %v1242, %v1244
    %v1246 = vadd.f32 %v1245, %v1157
    %v1247 = vmax.f32 %v1246, 0.0
    %s1248 = scalar_lea.vmem [#allocation10], 256
    %v1249 = vld [vmem:[%s1248] sm:$0xff]
    %v1250 = vld [vmem:[%s1248 + $0x8] sm:$0xff]
    %v1251 = vld [vmem:[%s1248 + $0x10] sm:$0xff]
    %v1252 = vld [vmem:[%s1248 + $0x18] sm:$0xff]
    %v1253 = vld [vmem:[%s1248 + $0x20] sm:$0xff]
    %v1254 = vld [vmem:[%s1248 + $0x28] sm:$0xff]
    %v1255 = vld [vmem:[%s1248 + $0x30] sm:$0xff]
    %v1256 = vld [vmem:[%s1248 + $0x38] sm:$0xff]
    %v1257 = vld [vmem:[%s1248 + $0x40] sm:$0xff]
    %v1258 = vld [vmem:[%s1248 + $0x48] sm:$0xff]
    %v1259 = vld [vmem:[%s1248 + $0x50] sm:$0xff]
    %v1260 = vld [vmem:[%s1248 + $0x58] sm:$0xff]
    %v1261 = vld [vmem:[%s1248 + $0x60] sm:$0xff]
    %v1262 = vld [vmem:[%s1248 + $0x68] sm:$0xff]
    %v1263 = vld [vmem:[%s1248 + $0x70] sm:$0xff]
    %v1264 = vld [vmem:[%s1248 + $0x78] sm:$0xff]
    %1265 = vmatpush.msra.mxu0 %v1264
    %1266 = vmatpush.msra.mxu0 %v1263
    %1267 = vmatpush.msra.mxu0 %v1262
    %1268 = vmatpush.msra.mxu0 %v1261
    %1269 = vmatpush.msra.mxu0 %v1260
    %1270 = vmatpush.msra.mxu0 %v1259
    %1271 = vmatpush.msra.mxu0 %v1258
    %1272 = vmatpush.msra.mxu0 %v1257
    %1273 = vmatpush.msra.mxu0 %v1256
    %1274 = vmatpush.msra.mxu0 %v1255
    %1275 = vmatpush.msra.mxu0 %v1254
    %1276 = vmatpush.msra.mxu0 %v1253
    %1277 = vmatpush.msra.mxu0 %v1252
    %1278 = vmatpush.msra.mxu0 %v1251
    %1279 = vmatpush.msra.mxu0 %v1250
    %1280 = vmatpush.msra.mxu0 %v1249
    %1281 = vmatmul.f32.gmra.mxu0 %v1247
    %v1282 = vpop.f32.mrf.mxu0
    %v1283 = vadd.f32 0.0, %v1282
    %1284 = vdwg.mxu0
    %v1285 = vadd.f32 %v1239, %v1283
    %s1286 = scalar_lea.vmem [#allocation4], 6
    %v1287 = vld [vmem:[%s1286] ss:$8 sm:$0x3]
    %s1288 = scalar_lea.vmem [#allocation4], 7
    %v1289 = vld [vmem:[%s1288] ss:$8 sm:$0x3]
    %v1290 = vmax.f32 %v1287, %v1289
    %v1291 = vadd.f32 %v1290, %v1157
    %v1292 = vmax.f32 %v1291, 0.0
    %s1293 = scalar_lea.vmem [#allocation10], 384
    %v1294 = vld [vmem:[%s1293] sm:$0xff]
    %v1295 = vld [vmem:[%s1293 + $0x8] sm:$0xff]
    %v1296 = vld [vmem:[%s1293 + $0x10] sm:$0xff]
    %v1297 = vld [vmem:[%s1293 + $0x18] sm:$0xff]
    %v1298 = vld [vmem:[%s1293 + $0x20] sm:$0xff]
    %v1299 = vld [vmem:[%s1293 + $0x28] sm:$0xff]
    %v1300 = vld [vmem:[%s1293 + $0x30] sm:$0xff]
    %v1301 = vld [vmem:[%s1293 + $0x38] sm:$0xff]
    %v1302 = vld [vmem:[%s1293 + $0x40] sm:$0xff]
    %v1303 = vld [vmem:[%s1293 + $0x48] sm:$0xff]
    %v1304 = vld [vmem:[%s1293 + $0x50] sm:$0xff]
    %v1305 = vld [vmem:[%s1293 + $0x58] sm:$0xff]
    %v1306 = vld [vmem:[%s1293 + $0x60] sm:$0xff]
    %v1307 = vld [vmem:[%s1293 + $0x68] sm:$0xff]
    %v1308 = vld [vmem:[%s1293 + $0x70] sm:$0xff]
    %v1309 = vld [vmem:[%s1293 + $0x78] sm:$0xff]
    %1310 = vmatpush.msra.mxu0 %v1309
    %1311 = vmatpush.msra.mxu0 %v1308
    %1312 = vmatpush.msra.mxu0 %v1307
    %1313 = vmatpush.msra.mxu0 %v1306
    %1314 = vmatpush.msra.mxu0 %v1305
    %1315 = vmatpush.msra.mxu0 %v1304
    %1316 = vmatpush.msra.mxu0 %v1303
    %1317 = vmatpush.msra.mxu0 %v1302
    %1318 = vmatpush.msra.mxu0 %v1301
    %1319 = vmatpush.msra.mxu0 %v1300
    %1320 = vmatpush.msra.mxu0 %v1299
    %1321 = vmatpush.msra.mxu0 %v1298
    %1322 = vmatpush.msra.mxu0 %v1297
    %1323 = vmatpush.msra.mxu0 %v1296
    %1324 = vmatpush.msra.mxu0 %v1295
    %1325 = vmatpush.msra.mxu0 %v1294
    %1326 = vmatmul.f32.gmra.mxu0 %v1292
    %v1327 = vpop.f32.mrf.mxu0
    %v1328 = vadd.f32 0.0, %v1327
    %1329 = vdwg.mxu0
    %v1330 = vadd.f32 %v1285, %v1328
    %v1331 = vld [vmem:[%s6] sm:$0x1]
    %v1333 = vperm.slane %v1331, 0
    %v1335 = vadd.f32 %v1330, %v1333
    %v1336 = vmax.f32 %v1335, 0.0
    %v1337 = vld [vmem:[%s7] sm:$0xff]
    %v1338 = vld [vmem:[%s7 + $0x8] sm:$0xff]
    %v1339 = vld [vmem:[%s7 + $0x10] sm:$0xff]
    %v1340 = vld [vmem:[%s7 + $0x18] sm:$0xff]
    %v1341 = vld [vmem:[%s7 + $0x20] sm:$0xff]
    %v1342 = vld [vmem:[%s7 + $0x28] sm:$0xff]
    %v1343 = vld [vmem:[%s7 + $0x30] sm:$0xff]
    %v1344 = vld [vmem:[%s7 + $0x38] sm:$0xff]
    %v1345 = vld [vmem:[%s7 + $0x40] sm:$0xff]
    %v1346 = vld [vmem:[%s7 + $0x48] sm:$0xff]
    %v1347 = vld [vmem:[%s7 + $0x50] sm:$0xff]
    %v1348 = vld [vmem:[%s7 + $0x58] sm:$0xff]
    %v1349 = vld [vmem:[%s7 + $0x60] sm:$0xff]
    %v1350 = vld [vmem:[%s7 + $0x68] sm:$0xff]
    %v1351 = vld [vmem:[%s7 + $0x70] sm:$0xff]
    %v1352 = vld [vmem:[%s7 + $0x78] sm:$0xff]
    %v1353 = vld [vmem:[%s8] sm:$0x1]
    %v1355 = vperm.slane %v1353, 0
    %1357 = vmatpush.msra.mxu0 %v1352
    %1358 = vmatpush.msra.mxu0 %v1351
    %1359 = vmatpush.msra.mxu0 %v1350
    %1360 = vmatpush.msra.mxu0 %v1349
    %1361 = vmatpush.msra.mxu0 %v1348
    %1362 = vmatpush.msra.mxu0 %v1347
    %1363 = vmatpush.msra.mxu0 %v1346
    %1364 = vmatpush.msra.mxu0 %v1345
    %1365 = vmatpush.msra.mxu0 %v1344
    %1366 = vmatpush.msra.mxu0 %v1343
    %1367 = vmatpush.msra.mxu0 %v1342
    %1368 = vmatpush.msra.mxu0 %v1341
    %1369 = vmatpush.msra.mxu0 %v1340
    %1370 = vmatpush.msra.mxu0 %v1339
    %1371 = vmatpush.msra.mxu0 %v1338
    %1372 = vmatpush.msra.mxu0 %v1337
    %1373 = vmatmul.f32.gmra.mxu0 %v1336
    %v1374 = vpop.f32.mrf.mxu0
    %v1375 = vadd.f32 %v1355, %v1374
    %1376 = vdwg.mxu0
    %v1377 = vmax.f32 %v1375, 0.0
    %v1378 = vld [vmem:[#allocation11] sm:$0xff]
    %v1379 = vld [vmem:[#allocation11 + $0x8] sm:$0xff]
    %v1380 = vld [vmem:[#allocation11 + $0x10] sm:$0xff]
    %v1381 = vld [vmem:[#allocation11 + $0x18] sm:$0xff]
    %v1382 = vld [vmem:[#allocation11 + $0x20] sm:$0xff]
    %v1383 = vld [vmem:[#allocation11 + $0x28] sm:$0xff]
    %v1384 = vld [vmem:[#allocation11 + $0x30] sm:$0xff]
    %v1385 = vld [vmem:[#allocation11 + $0x38] sm:$0xff]
    %v1386 = vld [vmem:[#allocation11 + $0x40] sm:$0xff]
    %v1387 = vld [vmem:[#allocation11 + $0x48] sm:$0xff]
    %v1388 = vld [vmem:[#allocation11 + $0x50] sm:$0xff]
    %v1389 = vld [vmem:[#allocation11 + $0x58] sm:$0xff]
    %v1390 = vld [vmem:[#allocation11 + $0x60] sm:$0xff]
    %v1391 = vld [vmem:[#allocation11 + $0x68] sm:$0xff]
    %v1392 = vld [vmem:[#allocation11 + $0x70] sm:$0xff]
    %v1393 = vld [vmem:[#allocation11 + $0x78] sm:$0xff]
    %v1394 = vld [vmem:[%s10] sm:$0x1]
    %v1396 = vperm.slane %v1394, 0
    %1398 = vmatpush.msra.mxu0 %v1393
    %1399 = vmatpush.msra.mxu0 %v1392
    %1400 = vmatpush.msra.mxu0 %v1391
    %1401 = vmatpush.msra.mxu0 %v1390
    %1402 = vmatpush.msra.mxu0 %v1389
    %1403 = vmatpush.msra.mxu0 %v1388
    %1404 = vmatpush.msra.mxu0 %v1387
    %1405 = vmatpush.msra.mxu0 %v1386
    %1406 = vmatpush.msra.mxu0 %v1385
    %1407 = vmatpush.msra.mxu0 %v1384
    %1408 = vmatpush.msra.mxu0 %v1383
    %1409 = vmatpush.msra.mxu0 %v1382
    %1410 = vmatpush.msra.mxu0 %v1381
    %1411 = vmatpush.msra.mxu0 %v1380
    %1412 = vmatpush.msra.mxu0 %v1379
    %1413 = vmatpush.msra.mxu0 %v1378
    %1414 = vmatmul.f32.gmra.mxu0 %v1377
    %v1415 = vpop.f32.mrf.mxu0
    %v1416 = vadd.f32 %v1396, %v1415
    %1417 = vdwg.mxu0
    %1418 = vst [vmem:[#allocation13] sm:$0x3] %v1416
    // Predicated region
    $region62: #{convnet_forward.1} parent=1 // pred_check
      _
    $region63: #{convnet_forward.1} parent=1 // pred_check_branch
      %1420 = sbr.rel (0) target = $region65
    $region64: #{convnet_forward.1} parent=1 // pred_region
      %1422 = vsyncadd [#allocation7], 0
      %s1424 = sshll.u32 [#allocation13], 4
      %s1425 = int_to_ptr.vmem [resolvable:$true] %s1424
      %s1426 = sshll.u32 %s11, 4
      %s1427 = int_to_ptr.hbm [resolvable:$true] %s1426
      %1429 = dma.vmem_to_hbm [thread:$0]  %s1425, 32, %s1427, [#allocation7]
    $region65: #{convnet_forward.1} parent=1 // pred_fallthru
      _
    // Predicated region
    $region66: #{convnet_forward.1} parent=1 // pred_check
      _
    $region67: #{convnet_forward.1} parent=1 // pred_check_branch
      %1431 = sbr.rel (0) target = $region69
    $region68: #{convnet_forward.1} parent=1 // pred_region
      %1433 = dma.done [#allocation7], 32
    $region69: #{convnet_forward.1} parent=1 // pred_fallthru
      _
    %1434 = vsyncpa [#allocation6], 1
    %1435 = vsyncpa [#allocation9], 1
    %1436 = vsyncpa [#allocation12], 1
    %1437 = vsyncpa [#allocation7], 1

</llo_original>
